<compile_context>
chip_gen: v5e
topology: v5e:2x2
jax: 0.10.0
libtpu: 0.0.40
codegen_flags: <defaults>
</compile_context>

<pallas_src>
import functools
import math

import jax
import jax.numpy as jnp
from jax.experimental import pallas as pl
from jax.experimental.pallas import tpu as pltpu

EPS = 1e-5                        # PyTorch default eps (BatchNorm2d/InstanceNorm2d/GroupNorm)
_COMPUTE_DTYPE = jnp.bfloat16     # MXU operand dtype (accumulation & epilogue stay f32)
_INTER_DTYPE = jnp.bfloat16       # dtype of intermediates inside a residual branch


def _vmem_limit():
    # v5e/v6e (128 MiB physical) -> 64 MiB scoped limit; v7x (64 MiB) -> 32 MiB.
    try:
        cap = pltpu.get_tpu_info().vmem_capacity_bytes
    except Exception:
        cap = 64 * 1024 * 1024
    return max(16 * 1024 * 1024, min(cap // 2, 64 * 1024 * 1024))


_VMEM_LIMIT = _vmem_limit()
_BLOCK_BUDGET = _VMEM_LIMIT // 4   # per-operand block target (leaves double-buffer headroom)


# ---------------------------------------------------------------------------
# activations (VPU/EUP ops only, applied on f32 accumulators inside kernels)
# ---------------------------------------------------------------------------
def _apply_act(x, act_type):
    if act_type == 'none':
        return x
    if act_type == 'relu':
        return jnp.maximum(x, 0.0)
    if act_type == 'lrelu':
        return jnp.where(x >= 0, x, 0.2 * x)
    if act_type == 'rrelu':
        # TODO(synk): RReLU randomizes the slope during training; eval-mode slope used.
        return jnp.where(x >= 0, x, ((1.0 / 8.0 + 1.0 / 3.0) / 2.0) * x)
    if act_type == 'sigmoid':
        return jax.nn.sigmoid(x)
    if act_type == 'tanh':
        return jnp.tanh(x)
    if act_type == 'gelu':
        return 0.5 * x * (1.0 + jax.lax.erf(x / math.sqrt(2.0)))
    if act_type == 'elu':
        return jnp.where(x > 0, x, jnp.expm1(x))
    raise NotImplementedError(f'act_type {act_type} is not implemented')


def _choose_block(total, unit_bytes, budget=None, mult=1, min_steps=1):
    """Largest divisor of `total` fitting `budget`; prefer >=min_steps grid steps (v7x)."""
    budget = _BLOCK_BUDGET if budget is None else budget
    cands = [d for d in range(1, total + 1)
             if total % d == 0 and (d == total or d % mult == 0)]
    good = [d for d in cands if d * unit_bytes <= budget and total // d >= min_steps]
    if not good:
        good = [d for d in cands if d * unit_bytes <= budget]
    # TODO(synk): if even the smallest legal block misses the budget a chunked two-pass
    # reduction would be needed; at these shapes it always fits.
    return max(good) if good else min(cands)


# ---------------------------------------------------------------------------
# direct conv kernel: shifted-matmul accumulation + fused bias/norm/residual/act
# ---------------------------------------------------------------------------
def _conv_kernel(kh, kw, Wp, span, count, act_type, norm_kind, has_res, *refs):
    """acc[o, t] = sum_{dy,dx,c} w[dy*kw+dx, o, c] * x[c, t + dy*Wp + dx]
    Column t = r*Wp + q is a valid output pixel iff q < Wo; the mask keeps the
    normalization statistics exact, garbage columns are cropped by the wrapper."""
    it = iter(refs)
    w_ref = next(it)
    b_ref = next(it)
    if norm_kind != 'none':
        m_ref = next(it)
        g_ref = next(it)
        be_ref = next(it)
        mat_ref = next(it) if norm_kind in ('layer', 'group') else None
    x_ref = next(it)
    r_ref = next(it) if has_res else None
    o_ref = next(it)

    cout = w_ref.shape[1]
    acc = jnp.zeros((cout, span), jnp.float32)
    for dy in range(kh):                                   # static, unrolled
        for dx in range(kw):
            xs = x_ref[0, :, pl.ds(dy * Wp + dx, span)]    # (Cin, span) bf16, in-VMEM slice
            acc = acc + jnp.dot(w_ref[dy * kw + dx], xs,
                                preferred_element_type=jnp.float32)
    acc = acc + b_ref[...]                                 # (Cout, 1) broadcast over lanes

    if norm_kind != 'none':
        mask = m_ref[...]                                  # (1, span): 1.0 on valid columns
        xm = acc * mask
        x2m = xm * acc
        if mat_ref is not None:                            # pool channels of each norm group
            xm = jnp.dot(mat_ref[...], xm, preferred_element_type=jnp.float32)
            x2m = jnp.dot(mat_ref[...], x2m, preferred_element_type=jnp.float32)
        s1 = jnp.sum(xm, axis=1, keepdims=True)            # (Cout, 1) single-pass stats
        s2 = jnp.sum(x2m, axis=1, keepdims=True)
        mean = s1 * (1.0 / count)
        var = jnp.maximum(s2 * (1.0 / count) - mean * mean, 0.0)
        inv = jax.lax.rsqrt(var + EPS)
        scale = g_ref[...] * inv
        shift = be_ref[...] - mean * scale
        acc = acc * scale + shift

    if r_ref is not None:
        acc = acc + r_ref[0].astype(jnp.float32)           # fused residual add
    acc = _apply_act(acc, act_type)
    o_ref[...] = acc[None].astype(o_ref.dtype)


def conv2d_direct(x, w_taps, bias2, *, kh, kw, pad, pad_type, act_type='none',
                  norm_kind='none', gamma=None, beta=None, norm_groups=1,
                  residual=None, out_dtype=None):
    """Stride-1 conv (padding applied here) with fused bias / norm / residual / act."""
    out_dtype = x.dtype if out_dtype is None else out_dtype
    N, cin, _, _ = x.shape
    xp = _pad2d(x, pad, pad_type)
    _, _, Hp, Wp = xp.shape
    Ho, Wo = Hp - kh + 1, Wp - kw + 1
    span = Ho * Wp                                  # width-padded flat output length
    Lx = Hp * Wp + (kw - 1)                         # flat input + tail pad for max shift
    taps, cout, _ = w_taps.shape

    x_flat = jnp.pad(xp.reshape(N, cin, Hp * Wp),
                     ((0, 0), (0, 0), (0, kw - 1))).astype(_COMPUTE_DTYPE)

    args = [w_taps, bias2]
    in_specs = [pl.BlockSpec((taps, cout, cin), lambda n: (0, 0, 0)),   # weights: resident
                pl.BlockSpec((cout, 1), lambda n: (0, 0))]              # bias:    resident
    count = 0.0
    if norm_kind != 'none':
        mask = ((jnp.arange(span) % Wp) < Wo).astype(jnp.float32).reshape(1, span)
        args += [mask,
                 gamma.reshape(cout, 1).astype(jnp.float32),
                 beta.reshape(cout, 1).astype(jnp.float32)]
        in_specs += [pl.BlockSpec((1, span), lambda n: (0, 0)),
                     pl.BlockSpec((cout, 1), lambda n: (0, 0)),
                     pl.BlockSpec((cout, 1), lambda n: (0, 0))]
        if norm_kind in ('layer', 'group'):
            groups = 1 if norm_kind == 'layer' else norm_groups
            gid = jnp.arange(cout) // (cout // groups)
            mat = (gid[:, None] == gid[None, :]).astype(jnp.float32)    # group-pool matrix
            args.append(mat)
            in_specs.append(pl.BlockSpec((cout, cout), lambda n: (0, 0)))
            count = float((cout // groups) * Ho * Wo)
        else:                                                           # instance
            count = float(Ho * Wo)

    args.append(x_flat)
    in_specs.append(pl.BlockSpec((1, cin, Lx), lambda n: (n, 0, 0)))
    has_res = residual is not None
    if has_res:
        res = jnp.pad(residual, ((0, 0), (0, 0), (0, 0), (0, Wp - Wo)))
        args.append(res.reshape(N, cout, span).astype(_COMPUTE_DTYPE))
        in_specs.append(pl.BlockSpec((1, cout, span), lambda n: (n, 0, 0)))

    # Whole-sample blocks: weights stay resident, norm statistics complete in-kernel,
    # and grid=(N,) gives >=2 "parallel" steps so both v7x TensorCores get work.
    est = (2 * cin * Lx * 2 + 2 * cout * span * jnp.dtype(out_dtype).itemsize
           + taps * cout * cin * 2 + (2 * cout * span * 2 if has_res else 0))
    if est > _VMEM_LIMIT:
        # TODO(synk): tile the Ho axis (with kh-1 halo rows) when a sample does not fit.
        raise NotImplementedError('spatial tiling for large samples is not implemented')

    kern = functools.partial(_conv_kernel, kh, kw, Wp, span, count, act_type,
                             norm_kind, has_res)
    out_flat = pl.pallas_call(
        kern,
        out_shape=jax.ShapeDtypeStruct((N, cout, span), out_dtype),
        grid=(N,),
        in_specs=in_specs,
        out_specs=pl.BlockSpec((1, cout, span), lambda n: (n, 0, 0)),
        compiler_params=pltpu.CompilerParams(
            dimension_semantics=("parallel",),
            vmem_limit_bytes=_VMEM_LIMIT),
    )(*args)
    # drop the kw-1 garbage columns of each output row (width-padded layout -> NCHW)
    return out_flat.reshape(N, cout, Ho, Wp)[:, :, :, :Wo]


# ---------------------------------------------------------------------------
# batch norm kernel (training-mode batch statistics, channel-tiled NCHW)
# ---------------------------------------------------------------------------
def _batch_norm_kernel(act_type, g_ref, b_ref, x_ref, o_ref):
    x = x_ref[...].astype(jnp.float32)                      # (N, Cb, L)
    cnt = x.shape[0] * x.shape[2]
    s1 = jnp.sum(x, axis=(0, 2), keepdims=True)             # (1, Cb, 1)
    s2 = jnp.sum(x * x, axis=(0, 2), keepdims=True)
    mean = s1 * (1.0 / cnt)
    var = jnp.maximum(s2 * (1.0 / cnt) - mean * mean, 0.0)
    inv = jax.lax.rsqrt(var + EPS)
    scale = g_ref[...] * inv
    shift = b_ref[...] - mean * scale
    o_ref[...] = _apply_act(x * scale + shift, act_type).astype(o_ref.dtype)


def _batch_norm(x, gamma, beta, act_type, out_dtype):
    # TODO(synk): training-mode statistics only (no running_mean/var eval path); a
    # chunked two-pass reduction is needed when N*H*W per channel block exceeds VMEM.
    N, C, H, W = x.shape
    L = H * W
    x3 = x.reshape(N, C, L)
    Cb = _choose_block(C, N * L * x3.dtype.itemsize, mult=8, min_steps=2)
    kern = functools.partial(_batch_norm_kernel, act_type)
    y3 = pl.pallas_call(
        kern,
        out_shape=jax.ShapeDtypeStruct(x3.shape, out_dtype),
        grid=(C // Cb,),
        in_specs=[
            pl.BlockSpec((1, Cb, 1), lambda c: (0, c, 0)),
            pl.BlockSpec((1, Cb, 1), lambda c: (0, c, 0)),
            pl.BlockSpec((N, Cb, L), lambda c: (0, c, 0)),
        ],
        out_specs=pl.BlockSpec((N, Cb, L), lambda c: (0, c, 0)),
        compiler_params=pltpu.CompilerParams(
            dimension_semantics=("parallel",),
            vmem_limit_bytes=_VMEM_LIMIT),
    )(gamma.reshape(1, C, 1).astype(jnp.float32),
      beta.reshape(1, C, 1).astype(jnp.float32), x3)
    return y3.reshape(N, C, H, W)


# ---------------------------------------------------------------------------
# module wrappers (mirror the PyTorch classes)
# ---------------------------------------------------------------------------
def _pad2d(x, pad, pad_type):
    if pad == 0 or pad_type == 'none':
        return x
    widths = ((0, 0), (0, 0), (pad, pad), (pad, pad))
    if pad_type == 'zero':
        return jnp.pad(x, widths)
    if pad_type == 'reflection':
        return jnp.pad(x, widths, mode='reflect')
    if pad_type == 'replication':
        return jnp.pad(x, widths, mode='edge')
    raise NotImplementedError(f'pad_type {pad_type} is not implemented')


class NormLayer:
    """Affine params + reference math.  'batch' runs as a standalone Pallas kernel;
    'instance'/'layer'/'group' are fused into the conv kernel epilogue by BlockCNA."""

    def __init__(self, channels, norm_type, affine=True, groups=1, *, key=None):
        if norm_type not in ('none', 'batch', 'instance', 'layer', 'group'):
            raise NotImplementedError(f'norm_type {norm_type} is not implemented')
        self.channels, self.norm_type, self.affine, self.groups = channels, norm_type, affine, groups
        if norm_type != 'none' and affine:
            key = jax.random.PRNGKey(0) if key is None else key
            k1, k2 = jax.random.split(key)
            self.gamma = 1.0 + 0.1 * jax.random.normal(k1, (channels,), jnp.float32)
            self.beta = 0.1 * jax.random.normal(k2, (channels,), jnp.float32)
        else:
            self.gamma = jnp.ones((channels,), jnp.float32)
            self.beta = jnp.zeros((channels,), jnp.float32)

    def __call__(self, x, act_type='none', out_dtype=None):
        out_dtype = x.dtype if out_dtype is None else out_dtype
        nt = self.norm_type
        if nt == 'none':
            y = x if act_type == 'none' else _apply_act(x.astype(jnp.float32), act_type)
            return y.astype(out_dtype)
        if nt == 'batch':
            return _batch_norm(x, self.gamma, self.beta, act_type, out_dtype)
        # standalone instance/layer/group path (unused by ResTruck: fused in the conv)
        return self.reference(x, act_type=act_type).astype(out_dtype)

    def reference(self, x, act_type='none'):
        N, C, H, W = x.shape
        nt = self.norm_type
        if nt == 'none':
            xn = x
        elif nt == 'batch':
            mean = x.mean(axis=(0, 2, 3), keepdims=True)
            var = ((x - mean) ** 2).mean(axis=(0, 2, 3), keepdims=True)
            xn = (x - mean) / jnp.sqrt(var + EPS)
        elif nt == 'instance':
            mean = x.mean(axis=(2, 3), keepdims=True)
            var = ((x - mean) ** 2).mean(axis=(2, 3), keepdims=True)
            xn = (x - mean) / jnp.sqrt(var + EPS)
        else:
            G = 1 if nt == 'layer' else self.groups
            xg = x.reshape(N, G, -1)
            mean = xg.mean(axis=2, keepdims=True)
            var = ((xg - mean) ** 2).mean(axis=2, keepdims=True)
            xn = ((xg - mean) / jnp.sqrt(var + EPS)).reshape(N, C, H, W)
        if nt != 'none':
            xn = xn * self.gamma[None, :, None, None] + self.beta[None, :, None, None]
        return _apply_act(xn, act_type)


class BlockCNA:
    """pad -> conv2d -> norm -> act.  Conv, bias, instance/layer/group norm, activation
    and (when requested) residual add + outer activation fuse into ONE Pallas kernel;
    batch norm runs as a second Pallas kernel."""

    def __init__(self, in_nc, out_nc, kernel_size, stride=1, groups=1, pad_type='zero',
                 act_type='none', norm_type='none', affine=True, norm_groups=1,
                 use_sn=False, *, key):
        if stride != 1:
            raise NotImplementedError('only stride=1 is used by ResTruck')
        if use_sn:
            # TODO(synk): spectral_norm weight reparametrization is not modeled.
            raise NotImplementedError('spectral norm is not implemented')
        self.k, self.groups, self.pad_type = kernel_size, groups, pad_type
        self.pad = (kernel_size - 1) // 2
        self.act_type, self.norm_type = act_type, norm_type
        with_bias = affine if norm_type not in ('batch', 'instance') else False
        kw_, kb_, kn_ = jax.random.split(key, 3)
        fan_in = (in_nc // groups) * kernel_size * kernel_size
        self.w = jax.random.normal(kw_, (out_nc, in_nc // groups, kernel_size, kernel_size),
                                   jnp.float32) / math.sqrt(fan_in)
        self.b = (0.2 * jax.random.normal(kb_, (out_nc,), jnp.float32)
                  if with_bias else None)
        self.norm = NormLayer(out_nc, norm_type, affine=affine, groups=norm_groups, key=kn_)
        # Block-diagonal dense weights: grouped convs run as ONE kernel call instead of a
        # Python loop of per-group pallas_calls.
        # TODO(synk): a dedicated depthwise/grouped kernel (grid axis over groups or a
        # VPU shift-MAC path) would avoid the zero-block FLOPs for large group counts.
        if groups > 1:
            cg_in, cg_out = in_nc // groups, out_nc // groups
            w_dense = jnp.zeros((out_nc, in_nc, kernel_size, kernel_size), jnp.float32)
            for g in range(groups):
                w_dense = w_dense.at[g * cg_out:(g + 1) * cg_out,
                                     g * cg_in:(g + 1) * cg_in].set(
                    self.w[g * cg_out:(g + 1) * cg_out])
        else:
            w_dense = self.w
        self.w_taps = (w_dense.transpose(2, 3, 0, 1)
                       .reshape(kernel_size * kernel_size, out_nc, in_nc)
                       .astype(_COMPUTE_DTYPE))
        bias = self.b if self.b is not None else jnp.zeros((out_nc,), jnp.float32)
        self.bias2 = bias.reshape(out_nc, 1).astype(jnp.float32)

    def __call__(self, x, *, residual=None, post_act=None, out_dtype=None):
        out_dtype = x.dtype if out_dtype is None else out_dtype
        nt = self.norm_type
        if nt in ('instance', 'layer', 'group'):
            # conv + norm + act fused: one (Cout, H*W) tile per sample holds full stats
            return conv2d_direct(x, self.w_taps, self.bias2, kh=self.k, kw=self.k,
                                 pad=self.pad, pad_type=self.pad_type,
                                 act_type=self.act_type, norm_kind=nt,
                                 gamma=self.norm.gamma, beta=self.norm.beta,
                                 norm_groups=self.norm.groups, out_dtype=out_dtype)
        if nt == 'batch':
            y = conv2d_direct(x, self.w_taps, self.bias2, kh=self.k, kw=self.k,
                              pad=self.pad, pad_type=self.pad_type,
                              act_type='none', out_dtype=_INTER_DTYPE)
            return self.norm(y, act_type=self.act_type, out_dtype=out_dtype)
        act = self.act_type if post_act is None else post_act
        return conv2d_direct(x, self.w_taps, self.bias2, kh=self.k, kw=self.k,
                             pad=self.pad, pad_type=self.pad_type, act_type=act,
                             residual=residual, out_dtype=out_dtype)

    def reference(self, x, *, residual=None, post_act=None):
        xp = _pad2d(x, self.pad, self.pad_type)
        y = jax.lax.conv_general_dilated(
            xp, self.w, window_strides=(1, 1), padding='VALID',
            dimension_numbers=('NCHW', 'OIHW', 'NCHW'),
            feature_group_count=self.groups,
            precision=jax.lax.Precision.HIGHEST)
        if self.b is not None:
            y = y + self.b[None, :, None, None]
        if self.norm_type == 'none':
            act = self.act_type if post_act is None else post_act
            if residual is not None:
                y = y + residual
            return _apply_act(y, act)
        return self.norm.reference(y, act_type=self.act_type)


class ResBlock:
    def __init__(self, nc, kernel_size, num_multiple=1, pad_type='zero', act_type='relu',
                 norm_type='none', affine=True, norm_groups=1, *, key):
        keys = jax.random.split(key, num_multiple)
        self.blocks = [BlockCNA(nc, nc, kernel_size, pad_type=pad_type, norm_type=norm_type,
                                affine=affine, norm_groups=norm_groups, act_type=act_type,
                                key=keys[i]) for i in range(num_multiple - 1)]
        self.blocks.append(BlockCNA(nc, nc, kernel_size, pad_type=pad_type, norm_type='none',
                                    affine=affine, norm_groups=norm_groups, act_type='none',
                                    key=keys[-1]))
        self.act_type = act_type

    def __call__(self, x):
        out = x
        for blk in self.blocks[:-1]:
            out = blk(out, out_dtype=_INTER_DTYPE)   # bf16 intermediates inside the branch
        # last conv of the branch: residual add + outer activation fused in-kernel
        return self.blocks[-1](out, residual=x, post_act=self.act_type, out_dtype=x.dtype)

    def reference(self, x):
        out = x
        for blk in self.blocks[:-1]:
            out = blk.reference(out)
        return self.blocks[-1].reference(out, residual=x, post_act=self.act_type)


class ResDWBlock:
    def __init__(self, nc, kernel_size, groups=1, num_multiple=1, pad_type='zero',
                 act_type='relu', norm_type='none', affine=True, norm_groups=1, *, key):
        keys = jax.random.split(key, 2 * (num_multiple - 1) + 1)
        self.blocks, ki = [], 0
        for _ in range(num_multiple - 1):
            self.blocks.append(BlockCNA(nc, nc, 1, groups=1, norm_type=norm_type,
                                        affine=affine, norm_groups=norm_groups,
                                        act_type=act_type, key=keys[ki])); ki += 1
            self.blocks.append(BlockCNA(nc, nc, kernel_size, groups=groups,
                                        norm_type=norm_type, affine=affine,
                                        norm_groups=norm_groups, pad_type=pad_type,
                                        act_type=act_type, key=keys[ki])); ki += 1
        self.blocks.append(BlockCNA(nc, nc, 1, norm_type='none', affine=affine,
                                    norm_groups=norm_groups, act_type='none', key=keys[ki]))
        self.act_type = act_type

    def __call__(self, x):
        out = x
        for blk in self.blocks[:-1]:
            out = blk(out, out_dtype=_INTER_DTYPE)
        return self.blocks[-1](out, residual=x, post_act=self.act_type, out_dtype=x.dtype)

    def reference(self, x):
        out = x
        for blk in self.blocks[:-1]:
            out = blk.reference(out)
        return self.blocks[-1].reference(out, residual=x, post_act=self.act_type)


class ResTruck:
    def __init__(self, nc, kernel_size, groups=1, num_multiple=1, num_blocks=1,
                 pad_type='zero', act_type='relu', norm_type='none', affine=True,
                 norm_groups=1, resblock_type='classic', *, key=None):
        key = jax.random.PRNGKey(0) if key is None else key
        keys = jax.random.split(key, max(num_blocks, 1))
        self.blocks = []
        for i in range(num_blocks):
            if resblock_type == 'classic':
                self.blocks.append(ResBlock(nc, kernel_size, num_multiple=num_multiple,
                                            pad_type=pad_type, act_type=act_type,
                                            norm_type=norm_type, affine=affine,
                                            norm_groups=norm_groups, key=keys[i]))
            elif resblock_type == 'dw':
                self.blocks.append(ResDWBlock(nc, kernel_size, groups=groups,
                                              num_multiple=num_multiple, pad_type=pad_type,
                                              act_type=act_type, norm_type=norm_type,
                                              affine=affine, norm_groups=norm_groups,
                                              key=keys[i]))
            else:
                raise NotImplementedError(f'resblock_type {resblock_type}')

    def __call__(self, x):
        for blk in self.blocks:
            x = blk(x)
        return x

    def reference(self, x):
        for blk in self.blocks:
            x = blk.reference(x)
        return x


if __name__ == '__main__':
    key = jax.random.PRNGKey(0)
    kx, kp = jax.random.split(key)
    x = jax.random.normal(kx, (2, 4, 16, 16), jnp.float32)   # NCHW, like PyTorch

    configs = [
        dict(resblock_type='classic', num_blocks=2, num_multiple=2,
             act_type='relu', norm_type='none'),
        dict(resblock_type='classic', num_blocks=1, num_multiple=2,
             act_type='lrelu', norm_type='group', norm_groups=2),
        dict(resblock_type='classic', num_blocks=1, num_multiple=2,
             act_type='relu', norm_type='batch'),
        dict(resblock_type='classic', num_blocks=1, num_multiple=2,
             act_type='relu', norm_type='layer'),
        dict(resblock_type='dw', num_blocks=1, num_multiple=2, groups=4,
             act_type='relu', norm_type='instance'),
    ]
    for cfg in configs:
        model = ResTruck(nc=4, kernel_size=3, key=kp, **cfg)
        y = jax.block_until_ready(jax.jit(model.__call__)(x))
        y_ref = model.reference(x)
        assert y.shape == x.shape and y.dtype == x.dtype
        err = float(jnp.max(jnp.abs(y - y_ref)))
        assert err < 5e-2, f"mismatch for {cfg}: max abs err {err}"
    print('KERNEL_OK')
</pallas_src>

<mosaic_0001>
module attributes {stable_mosaic.version = 11 : i64} {
  func.func @_conv_kernel(%arg0: i32, %arg1: memref<9x4x4xbf16, #tpu.memory_space<vmem>>, %arg2: memref<4x1xf32, #tpu.memory_space<vmem>>, %arg3: memref<1x4x326xbf16, #tpu.memory_space<vmem>>, %arg4: memref<1x4x288xbf16, #tpu.memory_space<vmem>>) attributes {dimension_semantics = [#tpu.dimension_semantics<parallel>], iteration_bounds = array<i64: 2>, scalar_prefetch = 0 : i64, scratch_operands = 0 : i64, tpu.core_type = #tpu.core_type<tc>, window_params = [{pipeline_mode = #tpu.pipeline_mode<synchronous>, transform_indices = @transform_0, window_bounds = array<i64: 9, 4, 4>}, {pipeline_mode = #tpu.pipeline_mode<synchronous>, transform_indices = @transform_1, window_bounds = array<i64: 4, 1>}, {transform_indices = @transform_2, window_bounds = array<i64: 1, 4, 326>}, {transform_indices = @transform_3, window_bounds = array<i64: 1, 4, 288>}]} {
    %cst = arith.constant 0.000000e+00 : f32
    %0 = vector.broadcast %cst : f32 to vector<4x288xf32>
    %c0 = arith.constant 0 : index
    %c0_0 = arith.constant 0 : index
    %c0_1 = arith.constant 0 : index
    %1 = vector.load %arg3[%c0, %c0_0, %c0_1] : memref<1x4x326xbf16, #tpu.memory_space<vmem>>, vector<1x4x288xbf16>
    %2 = vector.shape_cast %1 : vector<1x4x288xbf16> to vector<4x288xbf16>
    %c0_2 = arith.constant 0 : index
    %c0_3 = arith.constant 0 : index
    %c0_4 = arith.constant 0 : index
    %3 = vector.load %arg1[%c0_2, %c0_3, %c0_4] : memref<9x4x4xbf16, #tpu.memory_space<vmem>>, vector<1x4x4xbf16>
    %4 = vector.shape_cast %3 : vector<1x4x4xbf16> to vector<4x4xbf16>
    %cst_5 = arith.constant dense<0.000000e+00> : vector<4x288xf32>
    %5 = tpu.matmul %4, %2, %cst_5 {dimension_numbers = #tpu.dot_dimension_numbers<[1], [0], [0], [1], [0, 0, 1, 1], [], []>} : vector<4x4xbf16>, vector<4x288xbf16>, vector<4x288xf32> -> vector<4x288xf32>
    %6 = arith.addf %0, %5 : vector<4x288xf32>
    %c0_6 = arith.constant 0 : index
    %c0_7 = arith.constant 0 : index
    %c1 = arith.constant 1 : index
    %7 = vector.load %arg3[%c0_6, %c0_7, %c1] : memref<1x4x326xbf16, #tpu.memory_space<vmem>>, vector<1x4x288xbf16>
    %8 = vector.shape_cast %7 : vector<1x4x288xbf16> to vector<4x288xbf16>
    %c1_8 = arith.constant 1 : index
    %c0_9 = arith.constant 0 : index
    %c0_10 = arith.constant 0 : index
    %9 = vector.load %arg1[%c1_8, %c0_9, %c0_10] : memref<9x4x4xbf16, #tpu.memory_space<vmem>>, vector<1x4x4xbf16>
    %10 = vector.shape_cast %9 : vector<1x4x4xbf16> to vector<4x4xbf16>
    %cst_11 = arith.constant dense<0.000000e+00> : vector<4x288xf32>
    %11 = tpu.matmul %10, %8, %cst_11 {dimension_numbers = #tpu.dot_dimension_numbers<[1], [0], [0], [1], [0, 0, 1, 1], [], []>} : vector<4x4xbf16>, vector<4x288xbf16>, vector<4x288xf32> -> vector<4x288xf32>
    %12 = arith.addf %6, %11 : vector<4x288xf32>
    %c0_12 = arith.constant 0 : index
    %c0_13 = arith.constant 0 : index
    %c2 = arith.constant 2 : index
    %13 = vector.load %arg3[%c0_12, %c0_13, %c2] : memref<1x4x326xbf16, #tpu.memory_space<vmem>>, vector<1x4x288xbf16>
    %14 = vector.shape_cast %13 : vector<1x4x288xbf16> to vector<4x288xbf16>
    %c2_14 = arith.constant 2 : index
    %c0_15 = arith.constant 0 : index
    %c0_16 = arith.constant 0 : index
    %15 = vector.load %arg1[%c2_14, %c0_15, %c0_16] : memref<9x4x4xbf16, #tpu.memory_space<vmem>>, vector<1x4x4xbf16>
    %16 = vector.shape_cast %15 : vector<1x4x4xbf16> to vector<4x4xbf16>
    %cst_17 = arith.constant dense<0.000000e+00> : vector<4x288xf32>
    %17 = tpu.matmul %16, %14, %cst_17 {dimension_numbers = #tpu.dot_dimension_numbers<[1], [0], [0], [1], [0, 0, 1, 1], [], []>} : vector<4x4xbf16>, vector<4x288xbf16>, vector<4x288xf32> -> vector<4x288xf32>
    %18 = arith.addf %12, %17 : vector<4x288xf32>
    %c0_18 = arith.constant 0 : index
    %c0_19 = arith.constant 0 : index
    %c18 = arith.constant 18 : index
    %19 = vector.load %arg3[%c0_18, %c0_19, %c18] : memref<1x4x326xbf16, #tpu.memory_space<vmem>>, vector<1x4x288xbf16>
    %20 = vector.shape_cast %19 : vector<1x4x288xbf16> to vector<4x288xbf16>
    %c3 = arith.constant 3 : index
    %c0_20 = arith.constant 0 : index
    %c0_21 = arith.constant 0 : index
    %21 = vector.load %arg1[%c3, %c0_20, %c0_21] : memref<9x4x4xbf16, #tpu.memory_space<vmem>>, vector<1x4x4xbf16>
    %22 = vector.shape_cast %21 : vector<1x4x4xbf16> to vector<4x4xbf16>
    %cst_22 = arith.constant dense<0.000000e+00> : vector<4x288xf32>
    %23 = tpu.matmul %22, %20, %cst_22 {dimension_numbers = #tpu.dot_dimension_numbers<[1], [0], [0], [1], [0, 0, 1, 1], [], []>} : vector<4x4xbf16>, vector<4x288xbf16>, vector<4x288xf32> -> vector<4x288xf32>
    %24 = arith.addf %18, %23 : vector<4x288xf32>
    %c0_23 = arith.constant 0 : index
    %c0_24 = arith.constant 0 : index
    %c19 = arith.constant 19 : index
    %25 = vector.load %arg3[%c0_23, %c0_24, %c19] : memref<1x4x326xbf16, #tpu.memory_space<vmem>>, vector<1x4x288xbf16>
    %26 = vector.shape_cast %25 : vector<1x4x288xbf16> to vector<4x288xbf16>
    %c4 = arith.constant 4 : index
    %c0_25 = arith.constant 0 : index
    %c0_26 = arith.constant 0 : index
    %27 = vector.load %arg1[%c4, %c0_25, %c0_26] : memref<9x4x4xbf16, #tpu.memory_space<vmem>>, vector<1x4x4xbf16>
    %28 = vector.shape_cast %27 : vector<1x4x4xbf16> to vector<4x4xbf16>
    %cst_27 = arith.constant dense<0.000000e+00> : vector<4x288xf32>
    %29 = tpu.matmul %28, %26, %cst_27 {dimension_numbers = #tpu.dot_dimension_numbers<[1], [0], [0], [1], [0, 0, 1, 1], [], []>} : vector<4x4xbf16>, vector<4x288xbf16>, vector<4x288xf32> -> vector<4x288xf32>
    %30 = arith.addf %24, %29 : vector<4x288xf32>
    %c0_28 = arith.constant 0 : index
    %c0_29 = arith.constant 0 : index
    %c20 = arith.constant 20 : index
    %31 = vector.load %arg3[%c0_28, %c0_29, %c20] : memref<1x4x326xbf16, #tpu.memory_space<vmem>>, vector<1x4x288xbf16>
    %32 = vector.shape_cast %31 : vector<1x4x288xbf16> to vector<4x288xbf16>
    %c5 = arith.constant 5 : index
    %c0_30 = arith.constant 0 : index
    %c0_31 = arith.constant 0 : index
    %33 = vector.load %arg1[%c5, %c0_30, %c0_31] : memref<9x4x4xbf16, #tpu.memory_space<vmem>>, vector<1x4x4xbf16>
    %34 = vector.shape_cast %33 : vector<1x4x4xbf16> to vector<4x4xbf16>
    %cst_32 = arith.constant dense<0.000000e+00> : vector<4x288xf32>
    %35 = tpu.matmul %34, %32, %cst_32 {dimension_numbers = #tpu.dot_dimension_numbers<[1], [0], [0], [1], [0, 0, 1, 1], [], []>} : vector<4x4xbf16>, vector<4x288xbf16>, vector<4x288xf32> -> vector<4x288xf32>
    %36 = arith.addf %30, %35 : vector<4x288xf32>
    %c0_33 = arith.constant 0 : index
    %c0_34 = arith.constant 0 : index
    %c36 = arith.constant 36 : index
    %37 = vector.load %arg3[%c0_33, %c0_34, %c36] : memref<1x4x326xbf16, #tpu.memory_space<vmem>>, vector<1x4x288xbf16>
    %38 = vector.shape_cast %37 : vector<1x4x288xbf16> to vector<4x288xbf16>
    %c6 = arith.constant 6 : index
    %c0_35 = arith.constant 0 : index
    %c0_36 = arith.constant 0 : index
    %39 = vector.load %arg1[%c6, %c0_35, %c0_36] : memref<9x4x4xbf16, #tpu.memory_space<vmem>>, vector<1x4x4xbf16>
    %40 = vector.shape_cast %39 : vector<1x4x4xbf16> to vector<4x4xbf16>
    %cst_37 = arith.constant dense<0.000000e+00> : vector<4x288xf32>
    %41 = tpu.matmul %40, %38, %cst_37 {dimension_numbers = #tpu.dot_dimension_numbers<[1], [0], [0], [1], [0, 0, 1, 1], [], []>} : vector<4x4xbf16>, vector<4x288xbf16>, vector<4x288xf32> -> vector<4x288xf32>
    %42 = arith.addf %36, %41 : vector<4x288xf32>
    %c0_38 = arith.constant 0 : index
    %c0_39 = arith.constant 0 : index
    %c37 = arith.constant 37 : index
    %43 = vector.load %arg3[%c0_38, %c0_39, %c37] : memref<1x4x326xbf16, #tpu.memory_space<vmem>>, vector<1x4x288xbf16>
    %44 = vector.shape_cast %43 : vector<1x4x288xbf16> to vector<4x288xbf16>
    %c7 = arith.constant 7 : index
    %c0_40 = arith.constant 0 : index
    %c0_41 = arith.constant 0 : index
    %45 = vector.load %arg1[%c7, %c0_40, %c0_41] : memref<9x4x4xbf16, #tpu.memory_space<vmem>>, vector<1x4x4xbf16>
    %46 = vector.shape_cast %45 : vector<1x4x4xbf16> to vector<4x4xbf16>
    %cst_42 = arith.constant dense<0.000000e+00> : vector<4x288xf32>
    %47 = tpu.matmul %46, %44, %cst_42 {dimension_numbers = #tpu.dot_dimension_numbers<[1], [0], [0], [1], [0, 0, 1, 1], [], []>} : vector<4x4xbf16>, vector<4x288xbf16>, vector<4x288xf32> -> vector<4x288xf32>
    %48 = arith.addf %42, %47 : vector<4x288xf32>
    %c0_43 = arith.constant 0 : index
    %c0_44 = arith.constant 0 : index
    %c38 = arith.constant 38 : index
    %49 = vector.load %arg3[%c0_43, %c0_44, %c38] : memref<1x4x326xbf16, #tpu.memory_space<vmem>>, vector<1x4x288xbf16>
    %50 = vector.shape_cast %49 : vector<1x4x288xbf16> to vector<4x288xbf16>
    %c8 = arith.constant 8 : index
    %c0_45 = arith.constant 0 : index
    %c0_46 = arith.constant 0 : index
    %51 = vector.load %arg1[%c8, %c0_45, %c0_46] : memref<9x4x4xbf16, #tpu.memory_space<vmem>>, vector<1x4x4xbf16>
    %52 = vector.shape_cast %51 : vector<1x4x4xbf16> to vector<4x4xbf16>
    %cst_47 = arith.constant dense<0.000000e+00> : vector<4x288xf32>
    %53 = tpu.matmul %52, %50, %cst_47 {dimension_numbers = #tpu.dot_dimension_numbers<[1], [0], [0], [1], [0, 0, 1, 1], [], []>} : vector<4x4xbf16>, vector<4x288xbf16>, vector<4x288xf32> -> vector<4x288xf32>
    %54 = arith.addf %48, %53 : vector<4x288xf32>
    %c0_48 = arith.constant 0 : index
    %c0_49 = arith.constant 0 : index
    %55 = vector.load %arg2[%c0_48, %c0_49] : memref<4x1xf32, #tpu.memory_space<vmem>>, vector<4x1xf32>
    %56 = vector.broadcast %55 : vector<4x1xf32> to vector<4x288xf32>
    %57 = arith.addf %54, %56 : vector<4x288xf32>
    %cst_50 = arith.constant 0.000000e+00 : f32
    %58 = vector.broadcast %cst_50 : f32 to vector<4x288xf32>
    %59 = arith.maximumf %57, %58 : vector<4x288xf32>
    %60 = vector.shape_cast %59 : vector<4x288xf32> to vector<1x4x288xf32>
    %61 = arith.truncf %60 : vector<1x4x288xf32> to vector<1x4x288xbf16>
    %c0_51 = arith.constant 0 : index
    %c0_52 = arith.constant 0 : index
    %c0_53 = arith.constant 0 : index
    %62 = vector.load %arg4[%c0_51, %c0_52, %c0_53] : memref<1x4x288xbf16, #tpu.memory_space<vmem>>, vector<1x4x288xbf16>
    tpu.vector_store %arg4[%c0_51, %c0_52, %c0_53], %61 {strides = array<i32>} : memref<1x4x288xbf16, #tpu.memory_space<vmem>>, vector<1x4x288xbf16>,
    return
  }
  func.func @transform_0(%arg0: i32) -> (i32, i32, i32) {
    %c0_i32 = arith.constant 0 : i32
    %c0_i32_0 = arith.constant 0 : i32
    %c0_i32_1 = arith.constant 0 : i32
    %c0_i32_2 = arith.constant 0 : i32
    return %c0_i32, %c0_i32_0, %c0_i32_1 : i32, i32, i32
  }
  func.func @transform_1(%arg0: i32) -> (i32, i32) {
    %c0_i32 = arith.constant 0 : i32
    %c0_i32_0 = arith.constant 0 : i32
    %c0_i32_1 = arith.constant 0 : i32
    return %c0_i32, %c0_i32_0 : i32, i32
  }
  func.func @transform_2(%arg0: i32) -> (i32, i32, i32) {
    %c0_i32 = arith.constant 0 : i32
    %c0_i32_0 = arith.constant 0 : i32
    %c0_i32_1 = arith.constant 0 : i32
    return %arg0, %c0_i32, %c0_i32_0 : i32, i32, i32
  }
  func.func @transform_3(%arg0: i32) -> (i32, i32, i32) {
    %c0_i32 = arith.constant 0 : i32
    %c0_i32_0 = arith.constant 0 : i32
    %c0_i32_1 = arith.constant 0 : i32
    return %arg0, %c0_i32, %c0_i32_0 : i32, i32, i32
  }
}

module attributes {stable_mosaic.version = 11 : i64} {
  func.func @_conv_kernel(%arg0: i32, %arg1: memref<9x4x4xbf16, #tpu.memory_space<vmem>>, %arg2: memref<4x1xf32, #tpu.memory_space<vmem>>, %arg3: memref<1x4x326xbf16, #tpu.memory_space<vmem>>, %arg4: memref<1x4x288xbf16, #tpu.memory_space<vmem>>, %arg5: memref<1x4x288xf32, #tpu.memory_space<vmem>>) attributes {dimension_semantics = [#tpu.dimension_semantics<parallel>], iteration_bounds = array<i64: 2>, scalar_prefetch = 0 : i64, scratch_operands = 0 : i64, tpu.core_type = #tpu.core_type<tc>, window_params = [{pipeline_mode = #tpu.pipeline_mode<synchronous>, transform_indices = @transform_0, window_bounds = array<i64: 9, 4, 4>}, {pipeline_mode = #tpu.pipeline_mode<synchronous>, transform_indices = @transform_1, window_bounds = array<i64: 4, 1>}, {transform_indices = @transform_2, window_bounds = array<i64: 1, 4, 326>}, {transform_indices = @transform_3, window_bounds = array<i64: 1, 4, 288>}, {transform_indices = @transform_4, window_bounds = array<i64: 1, 4, 288>}]} {
    %cst = arith.constant 0.000000e+00 : f32
    %0 = vector.broadcast %cst : f32 to vector<4x288xf32>
    %c0 = arith.constant 0 : index
    %c0_0 = arith.constant 0 : index
    %c0_1 = arith.constant 0 : index
    %1 = vector.load %arg3[%c0, %c0_0, %c0_1] : memref<1x4x326xbf16, #tpu.memory_space<vmem>>, vector<1x4x288xbf16>
    %2 = vector.shape_cast %1 : vector<1x4x288xbf16> to vector<4x288xbf16>
    %c0_2 = arith.constant 0 : index
    %c0_3 = arith.constant 0 : index
    %c0_4 = arith.constant 0 : index
    %3 = vector.load %arg1[%c0_2, %c0_3, %c0_4] : memref<9x4x4xbf16, #tpu.memory_space<vmem>>, vector<1x4x4xbf16>
    %4 = vector.shape_cast %3 : vector<1x4x4xbf16> to vector<4x4xbf16>
    %cst_5 = arith.constant dense<0.000000e+00> : vector<4x288xf32>
    %5 = tpu.matmul %4, %2, %cst_5 {dimension_numbers = #tpu.dot_dimension_numbers<[1], [0], [0], [1], [0, 0, 1, 1], [], []>} : vector<4x4xbf16>, vector<4x288xbf16>, vector<4x288xf32> -> vector<4x288xf32>
    %6 = arith.addf %0, %5 : vector<4x288xf32>
    %c0_6 = arith.constant 0 : index
    %c0_7 = arith.constant 0 : index
    %c1 = arith.constant 1 : index
    %7 = vector.load %arg3[%c0_6, %c0_7, %c1] : memref<1x4x326xbf16, #tpu.memory_space<vmem>>, vector<1x4x288xbf16>
    %8 = vector.shape_cast %7 : vector<1x4x288xbf16> to vector<4x288xbf16>
    %c1_8 = arith.constant 1 : index
    %c0_9 = arith.constant 0 : index
    %c0_10 = arith.constant 0 : index
    %9 = vector.load %arg1[%c1_8, %c0_9, %c0_10] : memref<9x4x4xbf16, #tpu.memory_space<vmem>>, vector<1x4x4xbf16>
    %10 = vector.shape_cast %9 : vector<1x4x4xbf16> to vector<4x4xbf16>
    %cst_11 = arith.constant dense<0.000000e+00> : vector<4x288xf32>
    %11 = tpu.matmul %10, %8, %cst_11 {dimension_numbers = #tpu.dot_dimension_numbers<[1], [0], [0], [1], [0, 0, 1, 1], [], []>} : vector<4x4xbf16>, vector<4x288xbf16>, vector<4x288xf32> -> vector<4x288xf32>
    %12 = arith.addf %6, %11 : vector<4x288xf32>
    %c0_12 = arith.constant 0 : index
    %c0_13 = arith.constant 0 : index
    %c2 = arith.constant 2 : index
    %13 = vector.load %arg3[%c0_12, %c0_13, %c2] : memref<1x4x326xbf16, #tpu.memory_space<vmem>>, vector<1x4x288xbf16>
    %14 = vector.shape_cast %13 : vector<1x4x288xbf16> to vector<4x288xbf16>
    %c2_14 = arith.constant 2 : index
    %c0_15 = arith.constant 0 : index
    %c0_16 = arith.constant 0 : index
    %15 = vector.load %arg1[%c2_14, %c0_15, %c0_16] : memref<9x4x4xbf16, #tpu.memory_space<vmem>>, vector<1x4x4xbf16>
    %16 = vector.shape_cast %15 : vector<1x4x4xbf16> to vector<4x4xbf16>
    %cst_17 = arith.constant dense<0.000000e+00> : vector<4x288xf32>
    %17 = tpu.matmul %16, %14, %cst_17 {dimension_numbers = #tpu.dot_dimension_numbers<[1], [0], [0], [1], [0, 0, 1, 1], [], []>} : vector<4x4xbf16>, vector<4x288xbf16>, vector<4x288xf32> -> vector<4x288xf32>
    %18 = arith.addf %12, %17 : vector<4x288xf32>
    %c0_18 = arith.constant 0 : index
    %c0_19 = arith.constant 0 : index
    %c18 = arith.constant 18 : index
    %19 = vector.load %arg3[%c0_18, %c0_19, %c18] : memref<1x4x326xbf16, #tpu.memory_space<vmem>>, vector<1x4x288xbf16>
    %20 = vector.shape_cast %19 : vector<1x4x288xbf16> to vector<4x288xbf16>
    %c3 = arith.constant 3 : index
    %c0_20 = arith.constant 0 : index
    %c0_21 = arith.constant 0 : index
    %21 = vector.load %arg1[%c3, %c0_20, %c0_21] : memref<9x4x4xbf16, #tpu.memory_space<vmem>>, vector<1x4x4xbf16>
    %22 = vector.shape_cast %21 : vector<1x4x4xbf16> to vector<4x4xbf16>
    %cst_22 = arith.constant dense<0.000000e+00> : vector<4x288xf32>
    %23 = tpu.matmul %22, %20, %cst_22 {dimension_numbers = #tpu.dot_dimension_numbers<[1], [0], [0], [1], [0, 0, 1, 1], [], []>} : vector<4x4xbf16>, vector<4x288xbf16>, vector<4x288xf32> -> vector<4x288xf32>
    %24 = arith.addf %18, %23 : vector<4x288xf32>
    %c0_23 = arith.constant 0 : index
    %c0_24 = arith.constant 0 : index
    %c19 = arith.constant 19 : index
    %25 = vector.load %arg3[%c0_23, %c0_24, %c19] : memref<1x4x326xbf16, #tpu.memory_space<vmem>>, vector<1x4x288xbf16>
    %26 = vector.shape_cast %25 : vector<1x4x288xbf16> to vector<4x288xbf16>
    %c4 = arith.constant 4 : index
    %c0_25 = arith.constant 0 : index
    %c0_26 = arith.constant 0 : index
    %27 = vector.load %arg1[%c4, %c0_25, %c0_26] : memref<9x4x4xbf16, #tpu.memory_space<vmem>>, vector<1x4x4xbf16>
    %28 = vector.shape_cast %27 : vector<1x4x4xbf16> to vector<4x4xbf16>
    %cst_27 = arith.constant dense<0.000000e+00> : vector<4x288xf32>
    %29 = tpu.matmul %28, %26, %cst_27 {dimension_numbers = #tpu.dot_dimension_numbers<[1], [0], [0], [1], [0, 0, 1, 1], [], []>} : vector<4x4xbf16>, vector<4x288xbf16>, vector<4x288xf32> -> vector<4x288xf32>
    %30 = arith.addf %24, %29 : vector<4x288xf32>
    %c0_28 = arith.constant 0 : index
    %c0_29 = arith.constant 0 : index
    %c20 = arith.constant 20 : index
    %31 = vector.load %arg3[%c0_28, %c0_29, %c20] : memref<1x4x326xbf16, #tpu.memory_space<vmem>>, vector<1x4x288xbf16>
    %32 = vector.shape_cast %31 : vector<1x4x288xbf16> to vector<4x288xbf16>
    %c5 = arith.constant 5 : index
    %c0_30 = arith.constant 0 : index
    %c0_31 = arith.constant 0 : index
    %33 = vector.load %arg1[%c5, %c0_30, %c0_31] : memref<9x4x4xbf16, #tpu.memory_space<vmem>>, vector<1x4x4xbf16>
    %34 = vector.shape_cast %33 : vector<1x4x4xbf16> to vector<4x4xbf16>
    %cst_32 = arith.constant dense<0.000000e+00> : vector<4x288xf32>
    %35 = tpu.matmul %34, %32, %cst_32 {dimension_numbers = #tpu.dot_dimension_numbers<[1], [0], [0], [1], [0, 0, 1, 1], [], []>} : vector<4x4xbf16>, vector<4x288xbf16>, vector<4x288xf32> -> vector<4x288xf32>
    %36 = arith.addf %30, %35 : vector<4x288xf32>
    %c0_33 = arith.constant 0 : index
    %c0_34 = arith.constant 0 : index
    %c36 = arith.constant 36 : index
    %37 = vector.load %arg3[%c0_33, %c0_34, %c36] : memref<1x4x326xbf16, #tpu.memory_space<vmem>>, vector<1x4x288xbf16>
    %38 = vector.shape_cast %37 : vector<1x4x288xbf16> to vector<4x288xbf16>
    %c6 = arith.constant 6 : index
    %c0_35 = arith.constant 0 : index
    %c0_36 = arith.constant 0 : index
    %39 = vector.load %arg1[%c6, %c0_35, %c0_36] : memref<9x4x4xbf16, #tpu.memory_space<vmem>>, vector<1x4x4xbf16>
    %40 = vector.shape_cast %39 : vector<1x4x4xbf16> to vector<4x4xbf16>
    %cst_37 = arith.constant dense<0.000000e+00> : vector<4x288xf32>
    %41 = tpu.matmul %40, %38, %cst_37 {dimension_numbers = #tpu.dot_dimension_numbers<[1], [0], [0], [1], [0, 0, 1, 1], [], []>} : vector<4x4xbf16>, vector<4x288xbf16>, vector<4x288xf32> -> vector<4x288xf32>
    %42 = arith.addf %36, %41 : vector<4x288xf32>
    %c0_38 = arith.constant 0 : index
    %c0_39 = arith.constant 0 : index
    %c37 = arith.constant 37 : index
    %43 = vector.load %arg3[%c0_38, %c0_39, %c37] : memref<1x4x326xbf16, #tpu.memory_space<vmem>>, vector<1x4x288xbf16>
    %44 = vector.shape_cast %43 : vector<1x4x288xbf16> to vector<4x288xbf16>
    %c7 = arith.constant 7 : index
    %c0_40 = arith.constant 0 : index
    %c0_41 = arith.constant 0 : index
    %45 = vector.load %arg1[%c7, %c0_40, %c0_41] : memref<9x4x4xbf16, #tpu.memory_space<vmem>>, vector<1x4x4xbf16>
    %46 = vector.shape_cast %45 : vector<1x4x4xbf16> to vector<4x4xbf16>
    %cst_42 = arith.constant dense<0.000000e+00> : vector<4x288xf32>
    %47 = tpu.matmul %46, %44, %cst_42 {dimension_numbers = #tpu.dot_dimension_numbers<[1], [0], [0], [1], [0, 0, 1, 1], [], []>} : vector<4x4xbf16>, vector<4x288xbf16>, vector<4x288xf32> -> vector<4x288xf32>
    %48 = arith.addf %42, %47 : vector<4x288xf32>
    %c0_43 = arith.constant 0 : index
    %c0_44 = arith.constant 0 : index
    %c38 = arith.constant 38 : index
    %49 = vector.load %arg3[%c0_43, %c0_44, %c38] : memref<1x4x326xbf16, #tpu.memory_space<vmem>>, vector<1x4x288xbf16>
    %50 = vector.shape_cast %49 : vector<1x4x288xbf16> to vector<4x288xbf16>
    %c8 = arith.constant 8 : index
    %c0_45 = arith.constant 0 : index
    %c0_46 = arith.constant 0 : index
    %51 = vector.load %arg1[%c8, %c0_45, %c0_46] : memref<9x4x4xbf16, #tpu.memory_space<vmem>>, vector<1x4x4xbf16>
    %52 = vector.shape_cast %51 : vector<1x4x4xbf16> to vector<4x4xbf16>
    %cst_47 = arith.constant dense<0.000000e+00> : vector<4x288xf32>
    %53 = tpu.matmul %52, %50, %cst_47 {dimension_numbers = #tpu.dot_dimension_numbers<[1], [0], [0], [1], [0, 0, 1, 1], [], []>} : vector<4x4xbf16>, vector<4x288xbf16>, vector<4x288xf32> -> vector<4x288xf32>
    %54 = arith.addf %48, %53 : vector<4x288xf32>
    %c0_48 = arith.constant 0 : index
    %c0_49 = arith.constant 0 : index
    %55 = vector.load %arg2[%c0_48, %c0_49] : memref<4x1xf32, #tpu.memory_space<vmem>>, vector<4x1xf32>
    %56 = vector.broadcast %55 : vector<4x1xf32> to vector<4x288xf32>
    %57 = arith.addf %54, %56 : vector<4x288xf32>
    %c0_50 = arith.constant 0 : index
    %c0_51 = arith.constant 0 : index
    %c0_52 = arith.constant 0 : index
    %58 = vector.load %arg4[%c0_50, %c0_51, %c0_52] : memref<1x4x288xbf16, #tpu.memory_space<vmem>>, vector<1x4x288xbf16>
    %59 = vector.shape_cast %58 : vector<1x4x288xbf16> to vector<4x288xbf16>
    %60 = arith.extf %59 : vector<4x288xbf16> to vector<4x288xf32>
    %61 = arith.addf %57, %60 : vector<4x288xf32>
    %cst_53 = arith.constant 0.000000e+00 : f32
    %62 = vector.broadcast %cst_53 : f32 to vector<4x288xf32>
    %63 = arith.maximumf %61, %62 : vector<4x288xf32>
    %64 = vector.shape_cast %63 : vector<4x288xf32> to vector<1x4x288xf32>
    %c0_54 = arith.constant 0 : index
    %c0_55 = arith.constant 0 : index
    %c0_56 = arith.constant 0 : index
    %65 = vector.load %arg5[%c0_54, %c0_55, %c0_56] : memref<1x4x288xf32, #tpu.memory_space<vmem>>, vector<1x4x288xf32>
    tpu.vector_store %arg5[%c0_54, %c0_55, %c0_56], %64 {strides = array<i32>} : memref<1x4x288xf32, #tpu.memory_space<vmem>>, vector<1x4x288xf32>,
    return
  }
  func.func @transform_0(%arg0: i32) -> (i32, i32, i32) {
    %c0_i32 = arith.constant 0 : i32
    %c0_i32_0 = arith.constant 0 : i32
    %c0_i32_1 = arith.constant 0 : i32
    %c0_i32_2 = arith.constant 0 : i32
    return %c0_i32, %c0_i32_0, %c0_i32_1 : i32, i32, i32
  }
  func.func @transform_1(%arg0: i32) -> (i32, i32) {
    %c0_i32 = arith.constant 0 : i32
    %c0_i32_0 = arith.constant 0 : i32
    %c0_i32_1 = arith.constant 0 : i32
    return %c0_i32, %c0_i32_0 : i32, i32
  }
  func.func @transform_2(%arg0: i32) -> (i32, i32, i32) {
    %c0_i32 = arith.constant 0 : i32
    %c0_i32_0 = arith.constant 0 : i32
    %c0_i32_1 = arith.constant 0 : i32
    return %arg0, %c0_i32, %c0_i32_0 : i32, i32, i32
  }
  func.func @transform_3(%arg0: i32) -> (i32, i32, i32) {
    %c0_i32 = arith.constant 0 : i32
    %c0_i32_0 = arith.constant 0 : i32
    %c0_i32_1 = arith.constant 0 : i32
    return %arg0, %c0_i32, %c0_i32_0 : i32, i32, i32
  }
  func.func @transform_4(%arg0: i32) -> (i32, i32, i32) {
    %c0_i32 = arith.constant 0 : i32
    %c0_i32_0 = arith.constant 0 : i32
    %c0_i32_1 = arith.constant 0 : i32
    return %arg0, %c0_i32, %c0_i32_0 : i32, i32, i32
  }
}

</mosaic_0001>

<llo_original>
// kernel: a_call__.4
$region0: #{a_call__.4}
  #allocation0 [shape = 'u32[]', space=smem, size = 0x4, offset = 0x4, fixed_abs, tag = 'smem constant byte address 0x4 - core index']
  #allocation1 [shape = 'u32[72,128]{1,0:T(1,128)}', space=vmem, size = 0x9000, scoped, tag = 'internal scratch']
  %s0 = inlined_call_operand.vmem [shape: bf16[9,4,4], index: 0, kind: input, shape index: {}]
  %s1 = inlined_call_operand.vmem [shape: f32[4,1], index: 1, kind: input, shape index: {}]
  %s2 = inlined_call_operand.vmem [shape: bf16[2,4,326], index: 2, kind: input, shape index: {}]
  %s3 = inlined_call_operand.vmem [shape: bf16[2,4,288], index: 3, kind: output, shape index: {}]
  %s4 = sld [smem:[#allocation0]]
  $region45: #{a_call__.4} parent=0
    _
  %s6 = ssub.s32 1, %s4
  %s7 = scalar_select 0, %s6, %s4
  loop: start=0, step=1, limit=4
  $region2: #{a_call__.4} parent=0 // loop_pre_header
    _
  $region3: #{a_call__.4} parent=0 // loop_header
    %s9 = sphi 0, %s13
    %p10 = scmp.ge.s32.totalorder %s9, 4
    %s17 = sphi 0, %s17
    %s19 = sphi 0, %s17
    %s20 = sphi 0, %s19
    %s34 = sphi 0, %s20
    %s38 = sphi 0, %s38
    %s40 = sphi 0, %s38
    %s41 = sphi 0, %s40
    %s55 = sphi 0, %s41
    %s61 = sphi 0, %s63
    %s64 = sphi 0, %s61
    %s65 = sphi 0, %s64
    %s81 = sphi 0, %s65
    %s87 = sphi 0, %s89
    %s90 = sphi 0, %s87
    %s91 = sphi 0, %s90
    %s107 = sphi 0, %s91
  $region4: #{a_call__.4} parent=0 // loop_header_branch
    %12 = sbr.rel (%p10) target = $region8
  $region5: #{a_call__.4} parent=0 // loop_body
    %s14 = ssub.s32 %s9, 1
    %s15 = ssub.s32 %s9, 2
    %s16 = sadd.s32 %s9, 1
    %s18 = sadd.s32 %s17, 1
    %p21 = scmp.eq.s32.totalorder %s9, 1
    %p22 = scmp.ne.s32.totalorder %s17, %s19
    %p23 = scmp.eq.s32.totalorder %s9, 0
    %p24 = por %p22, %p23
    %p25 = scmp.ne.s32.totalorder %s17, %s19
    %p26 = scmp.eq.s32.totalorder %s14, 1
    %p27 = por %p25, %p26
    %p28 = scmp.ne.s32.totalorder %s19, %s20
    %p29 = scmp.eq.s32.totalorder %s14, 0
    %p30 = por %p28, %p29
    %p31 = scmp.ne.s32.totalorder %s19, %s20
    %p32 = scmp.eq.s32.totalorder %s15, 1
    %p33 = por %p31, %p32
    %p35 = scmp.ne.s32.totalorder %s20, %s34
    %p36 = scmp.eq.s32.totalorder %s15, 0
    %p37 = por %p35, %p36
    %s39 = sadd.s32 %s38, 1
    %p42 = scmp.eq.s32.totalorder %s9, 1
    %p43 = scmp.ne.s32.totalorder %s38, %s40
    %p44 = scmp.eq.s32.totalorder %s9, 0
    %p45 = por %p43, %p44
    %p46 = scmp.ne.s32.totalorder %s38, %s40
    %p47 = scmp.eq.s32.totalorder %s14, 1
    %p48 = por %p46, %p47
    %p49 = scmp.ne.s32.totalorder %s40, %s41
    %p50 = scmp.eq.s32.totalorder %s14, 0
    %p51 = por %p49, %p50
    %p52 = scmp.ne.s32.totalorder %s40, %s41
    %p53 = scmp.eq.s32.totalorder %s15, 1
    %p54 = por %p52, %p53
    %p56 = scmp.ne.s32.totalorder %s41, %s55
    %p57 = scmp.eq.s32.totalorder %s15, 0
    %p58 = por %p56, %p57
    %s59 = ssub.s32 %s9, %s16
    %p60 = scmp.eq.s32.totalorder %s59, 0
    %s62 = sadd.s32 %s61, 1
    %s63 = scalar_select %p60, %s61, %s62
    %p66 = pneg %p60
    %p67 = scmp.eq.s32.totalorder %s9, 1
    %p68 = por %p66, %p67
    %p69 = scmp.ne.s32.totalorder %s61, %s64
    %p70 = scmp.eq.s32.totalorder %s9, 0
    %p71 = por %p69, %p70
    %p72 = scmp.ne.s32.totalorder %s61, %s64
    %p73 = scmp.eq.s32.totalorder %s14, 1
    %p74 = por %p72, %p73
    %p75 = scmp.ne.s32.totalorder %s64, %s65
    %p76 = scmp.eq.s32.totalorder %s14, 0
    %p77 = por %p75, %p76
    %p78 = scmp.ne.s32.totalorder %s64, %s65
    %p79 = scmp.eq.s32.totalorder %s15, 1
    %p80 = por %p78, %p79
    %p82 = scmp.ne.s32.totalorder %s65, %s81
    %p83 = scmp.eq.s32.totalorder %s15, 0
    %p84 = por %p82, %p83
    %s85 = ssub.s32 %s9, %s16
    %p86 = scmp.eq.s32.totalorder %s85, 0
    %s88 = sadd.s32 %s87, 1
    %s89 = scalar_select %p86, %s87, %s88
    %p92 = pneg %p86
    %p93 = scmp.eq.s32.totalorder %s9, 1
    %p94 = por %p92, %p93
    %p95 = scmp.ne.s32.totalorder %s87, %s90
    %p96 = scmp.eq.s32.totalorder %s9, 0
    %p97 = por %p95, %p96
    %p98 = scmp.ne.s32.totalorder %s87, %s90
    %p99 = scmp.eq.s32.totalorder %s14, 1
    %p100 = por %p98, %p99
    %p101 = scmp.ne.s32.totalorder %s90, %s91
    %p102 = scmp.eq.s32.totalorder %s14, 0
    %p103 = por %p101, %p102
    %p104 = scmp.ne.s32.totalorder %s90, %s91
    %p105 = scmp.eq.s32.totalorder %s15, 1
    %p106 = por %p104, %p105
    %p108 = scmp.ne.s32.totalorder %s91, %s107
    %p109 = scmp.eq.s32.totalorder %s15, 0
    %p110 = por %p108, %p109
    %p111 = scmp.le.s32.totalorder 1, %s9
    %p112 = scmp.lt.s32.totalorder %s9, 3
    %p113 = pnand %p111, %p112
    %p114 = pneg %p113
    // Predicated region
    $region9: #{a_call__.4} parent=5 // pred_check
      _
    $region10: #{a_call__.4} parent=5 // pred_check_branch
      %116 = sbr.rel (%p113) target = $region12
    $region11: #{a_call__.4} parent=5 // pred_region
      %s117 = ssub.s32 %s9, 1
      // Predicated region
      $region13: #{a_call__.4} parent=11 // pred_check
        %p118 = pneg %p30
      $region14: #{a_call__.4} parent=11 // pred_check_branch
        %120 = sbr.rel (%p118) target = $region16
      $region15: #{a_call__.4} parent=11 // pred_region
        _
      $region16: #{a_call__.4} parent=11 // pred_fallthru
        _
      // Predicated region
      $region17: #{a_call__.4} parent=11 // pred_check
        %p121 = pneg %p51
      $region18: #{a_call__.4} parent=11 // pred_check_branch
        %123 = sbr.rel (%p121) target = $region20
      $region19: #{a_call__.4} parent=11 // pred_region
        _
      $region20: #{a_call__.4} parent=11 // pred_fallthru
        _
    $region12: #{a_call__.4} parent=5 // pred_fallthru
      _
    %p124 = scmp.lt.s32.totalorder %s9, 2
    // Predicated region
    $region21: #{a_call__.4} parent=5 // pred_check
      %p125 = pneg %p124
    $region22: #{a_call__.4} parent=5 // pred_check_branch
      %127 = sbr.rel (%p125) target = $region24
    $region23: #{a_call__.4} parent=5 // pred_region
      // Predicated region
      $region25: #{a_call__.4} parent=23 // pred_check
        %p128 = pneg %p71
      $region26: #{a_call__.4} parent=23 // pred_check_branch
        %130 = sbr.rel (%p128) target = $region28
      $region27: #{a_call__.4} parent=23 // pred_region
        %p131 = scmp.lt.s32.totalorder %s9, 1
        %s132 = scalar_select %p131, %s9, 1
        %s133 = smul.addr %s132, 3
        %s134 = smul.addr %s133, 2
        %s135 = scalar_lea.vmem %s2, %s134
      $region28: #{a_call__.4} parent=23 // pred_fallthru
        _
    $region24: #{a_call__.4} parent=5 // pred_fallthru
      _
    %p136 = scmp.le.s32.totalorder 1, %s9
    %p137 = scmp.lt.s32.totalorder %s9, 3
    %p138 = pnand %p136, %p137
    %p139 = pneg %p138
    // Predicated region
    $region29: #{a_call__.4} parent=5 // pred_check
      _
    $region30: #{a_call__.4} parent=5 // pred_check_branch
      %141 = sbr.rel (%p138) target = $region32
    $region31: #{a_call__.4} parent=5 // pred_region
      %s142 = ssub.s32 %s9, 1
      %p143 = pneg %p30
      %p144 = pneg %p27
      %p145 = pneg %p51
      %p146 = pneg %p48
      %p147 = scmp.lt.s32.totalorder %s14, 1
      %s148 = scalar_select %p147, %s14, 1
      %s149 = smul.addr %s148, 3
      %s150 = smul.addr %s149, 2
      %s151 = scalar_lea.vmem %s2, %s150
      %p152 = pneg %p77
      %p153 = pneg %p74
      %p154 = pneg %p103
      %p155 = pneg %p100
      %p156 = scmp.lt.s32.totalorder %s14, 1
      %s157 = scalar_select %p156, %s14, 1
      %s158 = smul.addr %s157, 3
      %s159 = smul.addr %s158, 2
      %s160 = scalar_lea.vmem %s3, %s159
      %p161 = scmp.lt.s32.totalorder %s14, 1
      %s162 = scalar_select %p161, %s14, 1
      %s163 = smul.addr %s162, 3
      %s164 = smul.addr %s163, 2
      %s165 = scalar_lea.vmem %s2, %s164
      %p166 = scmp.lt.s32.totalorder %s14, 1
      %s167 = scalar_select %p166, %s14, 1
      %s168 = smul.addr %s167, 3
      %s169 = smul.addr %s168, 2
      %s170 = scalar_lea.vmem %s3, %s169
      %v172 = vld [vmem:[%s165] sm:$0x3f]
      %v173 = vld [vmem:[%s0] sm:$0x3]
      %s174 = scalar_lea.vmem %s0, 2
      %v175 = vld [vmem:[%s174] sm:$0x3]
      %177 = vst [vmem:[#allocation1] ss:$4 sm:$0xff] %v172
      %v178 = vld.sshfl [vmem:[#allocation1] sm:$0xff pattern:$0x73625140]
      %v180 = vld.sshfl [vmem:[#allocation1 + $0x8] sm:$0xff pattern:$0x73625140]
      %v182 = vld.sshfl [vmem:[#allocation1 + $0x10] sm:$0xff pattern:$0x73625140]
      %184 = vrot.lane.b32.xlu0 %v178, 127
      %v185 = vpop.permute.xlu0 %184
      %186 = vrot.lane.b32.xlu0 %v180, 127
      %v187 = vpop.permute.xlu0 %186
      %188 = vrot.lane.b32.xlu0 %v182, 127
      %v189 = vpop.permute.xlu0 %188
      %vm190 = vcmask 1039360
      %v191 = vsel %vm190, %v185, %v187
      %v192 = vsel %vm190, %v187, %v189
      %vm193 = vcmask 31744
      %v195 = vsel %vm193, %v175, 0
      %vm197 = vcmask 1041408
      %v199 = vsel %vm197, %v191, 0
      %v202 = vsel %vm197, %v192, 0
      %v205 = vsel %vm197, %v189, 0
      %207 = vmatpush.bf16.msra.mxu0 0
      %208 = vmatpush.bf16.msra.mxu0 0
      %209 = vmatpush.bf16.msra.mxu0 0
      %210 = vmatpush.bf16.msra.mxu0 0
      %211 = vmatpush.bf16.msra.mxu0 0
      %212 = vmatpush.bf16.msra.mxu0 0
      %213 = vmatpush.bf16.msra.mxu0 0
      %214 = vmatpush.bf16.msra.mxu0 %v199
      %215 = vmatmul.bf16.gmra.mxu0 %v195
      %v216 = vpop.f32.mrf.mxu0
      %v217 = vadd.f32 0.0, %v216
      %v218 = vpop.f32.mrf.mxu0
      %219 = vdwg.mxu0
      %220 = vmatpush.bf16.msra.mxu0 0
      %221 = vmatpush.bf16.msra.mxu0 0
      %222 = vmatpush.bf16.msra.mxu0 0
      %223 = vmatpush.bf16.msra.mxu0 0
      %224 = vmatpush.bf16.msra.mxu0 0
      %225 = vmatpush.bf16.msra.mxu0 0
      %226 = vmatpush.bf16.msra.mxu0 0
      %227 = vmatpush.bf16.msra.mxu0 %v202
      %228 = vmatmul.bf16.gmra.mxu0 %v195
      %v229 = vpop.f32.mrf.mxu0
      %v230 = vadd.f32 0.0, %v229
      %v231 = vpop.f32.mrf.mxu0
      %232 = vdwg.mxu0
      %233 = vmatpush.bf16.msra.mxu0 0
      %234 = vmatpush.bf16.msra.mxu0 0
      %235 = vmatpush.bf16.msra.mxu0 0
      %236 = vmatpush.bf16.msra.mxu0 0
      %237 = vmatpush.bf16.msra.mxu0 0
      %238 = vmatpush.bf16.msra.mxu0 0
      %239 = vmatpush.bf16.msra.mxu0 0
      %240 = vmatpush.bf16.msra.mxu0 %v205
      %241 = vmatmul.bf16.gmra.mxu0 %v195
      %v242 = vpop.f32.mrf.mxu0
      %v243 = vadd.f32 0.0, %v242
      %v244 = vpop.f32.mrf.mxu0
      %245 = vdwg.mxu0
      %246 = vst [vmem:[#allocation1] ss:$4 sm:$0xff] %v172
      %v247 = vld.sshfl [vmem:[#allocation1] sm:$0xff pattern:$0x73625140]
      %v248 = vld.sshfl [vmem:[#allocation1 + $0x8] sm:$0xff pattern:$0x73625140]
      %v249 = vld.sshfl [vmem:[#allocation1 + $0x10] sm:$0xff pattern:$0x73625140]
      %v251 = vsel %vm193, %v173, 0
      %v253 = vsel %vm197, %v247, 0
      %v255 = vsel %vm197, %v248, 0
      %v257 = vsel %vm197, %v249, 0
      %259 = vmatpush.bf16.msra.mxu0 0
      %260 = vmatpush.bf16.msra.mxu0 0
      %261 = vmatpush.bf16.msra.mxu0 0
      %262 = vmatpush.bf16.msra.mxu0 0
      %263 = vmatpush.bf16.msra.mxu0 0
      %264 = vmatpush.bf16.msra.mxu0 0
      %265 = vmatpush.bf16.msra.mxu0 0
      %266 = vmatpush.bf16.msra.mxu0 %v253
      %267 = vmatmul.bf16.gmra.mxu0 %v251
      %v268 = vpop.f32.mrf.mxu0
      %v269 = vadd.f32 %v217, %v268
      %v270 = vpop.f32.mrf.mxu0
      %271 = vdwg.mxu0
      %272 = vmatpush.bf16.msra.mxu0 0
      %273 = vmatpush.bf16.msra.mxu0 0
      %274 = vmatpush.bf16.msra.mxu0 0
      %275 = vmatpush.bf16.msra.mxu0 0
      %276 = vmatpush.bf16.msra.mxu0 0
      %277 = vmatpush.bf16.msra.mxu0 0
      %278 = vmatpush.bf16.msra.mxu0 0
      %279 = vmatpush.bf16.msra.mxu0 %v255
      %280 = vmatmul.bf16.gmra.mxu0 %v251
      %v281 = vpop.f32.mrf.mxu0
      %v282 = vadd.f32 %v230, %v281
      %v283 = vpop.f32.mrf.mxu0
      %284 = vdwg.mxu0
      %285 = vmatpush.bf16.msra.mxu0 0
      %286 = vmatpush.bf16.msra.mxu0 0
      %287 = vmatpush.bf16.msra.mxu0 0
      %288 = vmatpush.bf16.msra.mxu0 0
      %289 = vmatpush.bf16.msra.mxu0 0
      %290 = vmatpush.bf16.msra.mxu0 0
      %291 = vmatpush.bf16.msra.mxu0 0
      %292 = vmatpush.bf16.msra.mxu0 %v257
      %293 = vmatmul.bf16.gmra.mxu0 %v251
      %v294 = vpop.f32.mrf.mxu0
      %v295 = vadd.f32 %v243, %v294
      %v296 = vpop.f32.mrf.mxu0
      %297 = vdwg.mxu0
      %v298 = vld [vmem:[%s165] sm:$0x3f]
      %s299 = scalar_lea.vmem %s0, 4
      %v300 = vld [vmem:[%s299] sm:$0x3]
      %302 = vst [vmem:[#allocation1] ss:$4 sm:$0xff] %v298
      %v303 = vld.sshfl [vmem:[#allocation1] sm:$0xff pattern:$0x73625140]
      %v305 = vld.sshfl [vmem:[#allocation1 + $0x8] sm:$0xff pattern:$0x73625140]
      %v307 = vld.sshfl [vmem:[#allocation1 + $0x10] sm:$0xff pattern:$0x73625140]
      %309 = vrot.lane.b32.xlu0 %v303, 126
      %v310 = vpop.permute.xlu0 %309
      %311 = vrot.lane.b32.xlu0 %v305, 126
      %v312 = vpop.permute.xlu0 %311
      %313 = vrot.lane.b32.xlu0 %v307, 126
      %v314 = vpop.permute.xlu0 %313
      %vm315 = vcmask 1031168
      %v316 = vsel %vm315, %v310, %v312
      %v317 = vsel %vm315, %v312, %v314
      %v319 = vsel %vm193, %v300, 0
      %v322 = vsel %vm197, %v316, 0
      %v325 = vsel %vm197, %v317, 0
      %v328 = vsel %vm197, %v314, 0
      %330 = vmatpush.bf16.msra.mxu0 0
      %331 = vmatpush.bf16.msra.mxu0 0
      %332 = vmatpush.bf16.msra.mxu0 0
      %333 = vmatpush.bf16.msra.mxu0 0
      %334 = vmatpush.bf16.msra.mxu0 0
      %335 = vmatpush.bf16.msra.mxu0 0
      %336 = vmatpush.bf16.msra.mxu0 0
      %337 = vmatpush.bf16.msra.mxu0 %v322
      %338 = vmatmul.bf16.gmra.mxu0 %v319
      %v339 = vpop.f32.mrf.mxu0
      %v340 = vadd.f32 0.0, %v339
      %v341 = vpop.f32.mrf.mxu0
      %342 = vdwg.mxu0
      %343 = vmatpush.bf16.msra.mxu0 0
      %344 = vmatpush.bf16.msra.mxu0 0
      %345 = vmatpush.bf16.msra.mxu0 0
      %346 = vmatpush.bf16.msra.mxu0 0
      %347 = vmatpush.bf16.msra.mxu0 0
      %348 = vmatpush.bf16.msra.mxu0 0
      %349 = vmatpush.bf16.msra.mxu0 0
      %350 = vmatpush.bf16.msra.mxu0 %v325
      %351 = vmatmul.bf16.gmra.mxu0 %v319
      %v352 = vpop.f32.mrf.mxu0
      %v353 = vadd.f32 0.0, %v352
      %v354 = vpop.f32.mrf.mxu0
      %355 = vdwg.mxu0
      %356 = vmatpush.bf16.msra.mxu0 0
      %357 = vmatpush.bf16.msra.mxu0 0
      %358 = vmatpush.bf16.msra.mxu0 0
      %359 = vmatpush.bf16.msra.mxu0 0
      %360 = vmatpush.bf16.msra.mxu0 0
      %361 = vmatpush.bf16.msra.mxu0 0
      %362 = vmatpush.bf16.msra.mxu0 0
      %363 = vmatpush.bf16.msra.mxu0 %v328
      %364 = vmatmul.bf16.gmra.mxu0 %v319
      %v365 = vpop.f32.mrf.mxu0
      %v366 = vadd.f32 0.0, %v365
      %v367 = vpop.f32.mrf.mxu0
      %368 = vdwg.mxu0
      %v369 = vadd.f32 %v269, %v340
      %v370 = vadd.f32 %v282, %v353
      %v371 = vadd.f32 %v295, %v366
      %v372 = vld [vmem:[%s165] sm:$0x3f]
      %s373 = scalar_lea.vmem %s0, 6
      %v374 = vld [vmem:[%s373] sm:$0x3]
      %376 = vst [vmem:[#allocation1] ss:$4 sm:$0xff] %v372
      %v377 = vld.sshfl [vmem:[#allocation1] sm:$0xff pattern:$0x73625140]
      %v379 = vld.sshfl [vmem:[#allocation1 + $0x8] sm:$0xff pattern:$0x73625140]
      %v381 = vld.sshfl [vmem:[#allocation1 + $0x10] sm:$0xff pattern:$0x73625140]
      %383 = vrot.lane.b32.xlu0 %v377, 110
      %v384 = vpop.permute.xlu0 %383
      %385 = vrot.lane.b32.xlu0 %v379, 110
      %v386 = vpop.permute.xlu0 %385
      %387 = vrot.lane.b32.xlu0 %v381, 110
      %v388 = vpop.permute.xlu0 %387
      %vm389 = vcmask 900096
      %v390 = vsel %vm389, %v384, %v386
      %v391 = vsel %vm389, %v386, %v388
      %v393 = vsel %vm193, %v374, 0
      %v396 = vsel %vm197, %v390, 0
      %v399 = vsel %vm197, %v391, 0
      %v402 = vsel %vm197, %v388, 0
      %404 = vmatpush.bf16.msra.mxu0 0
      %405 = vmatpush.bf16.msra.mxu0 0
      %406 = vmatpush.bf16.msra.mxu0 0
      %407 = vmatpush.bf16.msra.mxu0 0
      %408 = vmatpush.bf16.msra.mxu0 0
      %409 = vmatpush.bf16.msra.mxu0 0
      %410 = vmatpush.bf16.msra.mxu0 0
      %411 = vmatpush.bf16.msra.mxu0 %v396
      %412 = vmatmul.bf16.gmra.mxu0 %v393
      %v413 = vpop.f32.mrf.mxu0
      %v414 = vadd.f32 0.0, %v413
      %v415 = vpop.f32.mrf.mxu0
      %416 = vdwg.mxu0
      %417 = vmatpush.bf16.msra.mxu0 0
      %418 = vmatpush.bf16.msra.mxu0 0
      %419 = vmatpush.bf16.msra.mxu0 0
      %420 = vmatpush.bf16.msra.mxu0 0
      %421 = vmatpush.bf16.msra.mxu0 0
      %422 = vmatpush.bf16.msra.mxu0 0
      %423 = vmatpush.bf16.msra.mxu0 0
      %424 = vmatpush.bf16.msra.mxu0 %v399
      %425 = vmatmul.bf16.gmra.mxu0 %v393
      %v426 = vpop.f32.mrf.mxu0
      %v427 = vadd.f32 0.0, %v426
      %v428 = vpop.f32.mrf.mxu0
      %429 = vdwg.mxu0
      %430 = vmatpush.bf16.msra.mxu0 0
      %431 = vmatpush.bf16.msra.mxu0 0
      %432 = vmatpush.bf16.msra.mxu0 0
      %433 = vmatpush.bf16.msra.mxu0 0
      %434 = vmatpush.bf16.msra.mxu0 0
      %435 = vmatpush.bf16.msra.mxu0 0
      %436 = vmatpush.bf16.msra.mxu0 0
      %437 = vmatpush.bf16.msra.mxu0 %v402
      %438 = vmatmul.bf16.gmra.mxu0 %v393
      %v439 = vpop.f32.mrf.mxu0
      %v440 = vadd.f32 0.0, %v439
      %v441 = vpop.f32.mrf.mxu0
      %442 = vdwg.mxu0
      %v443 = vadd.f32 %v369, %v414
      %v444 = vadd.f32 %v370, %v427
      %v445 = vadd.f32 %v371, %v440
      %v446 = vld [vmem:[%s165] sm:$0x3f]
      %s447 = scalar_lea.vmem %s0, 8
      %v448 = vld [vmem:[%s447] sm:$0x3]
      %450 = vst [vmem:[#allocation1] ss:$4 sm:$0xff] %v446
      %v451 = vld.sshfl [vmem:[#allocation1] sm:$0xff pattern:$0x73625140]
      %v453 = vld.sshfl [vmem:[#allocation1 + $0x8] sm:$0xff pattern:$0x73625140]
      %v455 = vld.sshfl [vmem:[#allocation1 + $0x10] sm:$0xff pattern:$0x73625140]
      %457 = vrot.lane.b32.xlu0 %v451, 109
      %v458 = vpop.permute.xlu0 %457
      %459 = vrot.lane.b32.xlu0 %v453, 109
      %v460 = vpop.permute.xlu0 %459
      %461 = vrot.lane.b32.xlu0 %v455, 109
      %v462 = vpop.permute.xlu0 %461
      %vm463 = vcmask 891904
      %v464 = vsel %vm463, %v458, %v460
      %v465 = vsel %vm463, %v460, %v462
      %v467 = vsel %vm193, %v448, 0
      %v470 = vsel %vm197, %v464, 0
      %v473 = vsel %vm197, %v465, 0
      %v476 = vsel %vm197, %v462, 0
      %478 = vmatpush.bf16.msra.mxu0 0
      %479 = vmatpush.bf16.msra.mxu0 0
      %480 = vmatpush.bf16.msra.mxu0 0
      %481 = vmatpush.bf16.msra.mxu0 0
      %482 = vmatpush.bf16.msra.mxu0 0
      %483 = vmatpush.bf16.msra.mxu0 0
      %484 = vmatpush.bf16.msra.mxu0 0
      %485 = vmatpush.bf16.msra.mxu0 %v470
      %486 = vmatmul.bf16.gmra.mxu0 %v467
      %v487 = vpop.f32.mrf.mxu0
      %v488 = vadd.f32 0.0, %v487
      %v489 = vpop.f32.mrf.mxu0
      %490 = vdwg.mxu0
      %491 = vmatpush.bf16.msra.mxu0 0
      %492 = vmatpush.bf16.msra.mxu0 0
      %493 = vmatpush.bf16.msra.mxu0 0
      %494 = vmatpush.bf16.msra.mxu0 0
      %495 = vmatpush.bf16.msra.mxu0 0
      %496 = vmatpush.bf16.msra.mxu0 0
      %497 = vmatpush.bf16.msra.mxu0 0
      %498 = vmatpush.bf16.msra.mxu0 %v473
      %499 = vmatmul.bf16.gmra.mxu0 %v467
      %v500 = vpop.f32.mrf.mxu0
      %v501 = vadd.f32 0.0, %v500
      %v502 = vpop.f32.mrf.mxu0
      %503 = vdwg.mxu0
      %504 = vmatpush.bf16.msra.mxu0 0
      %505 = vmatpush.bf16.msra.mxu0 0
      %506 = vmatpush.bf16.msra.mxu0 0
      %507 = vmatpush.bf16.msra.mxu0 0
      %508 = vmatpush.bf16.msra.mxu0 0
      %509 = vmatpush.bf16.msra.mxu0 0
      %510 = vmatpush.bf16.msra.mxu0 0
      %511 = vmatpush.bf16.msra.mxu0 %v476
      %512 = vmatmul.bf16.gmra.mxu0 %v467
      %v513 = vpop.f32.mrf.mxu0
      %v514 = vadd.f32 0.0, %v513
      %v515 = vpop.f32.mrf.mxu0
      %516 = vdwg.mxu0
      %v517 = vadd.f32 %v443, %v488
      %v518 = vadd.f32 %v444, %v501
      %v519 = vadd.f32 %v445, %v514
      %v520 = vld [vmem:[%s165] sm:$0x3f]
      %s521 = scalar_lea.vmem %s0, 10
      %v522 = vld [vmem:[%s521] sm:$0x3]
      %524 = vst [vmem:[#allocation1] ss:$4 sm:$0xff] %v520
      %v525 = vld.sshfl [vmem:[#allocation1] sm:$0xff pattern:$0x73625140]
      %v527 = vld.sshfl [vmem:[#allocation1 + $0x8] sm:$0xff pattern:$0x73625140]
      %v529 = vld.sshfl [vmem:[#allocation1 + $0x10] sm:$0xff pattern:$0x73625140]
      %531 = vrot.lane.b32.xlu0 %v525, 108
      %v532 = vpop.permute.xlu0 %531
      %533 = vrot.lane.b32.xlu0 %v527, 108
      %v534 = vpop.permute.xlu0 %533
      %535 = vrot.lane.b32.xlu0 %v529, 108
      %v536 = vpop.permute.xlu0 %535
      %vm537 = vcmask 883712
      %v538 = vsel %vm537, %v532, %v534
      %v539 = vsel %vm537, %v534, %v536
      %v541 = vsel %vm193, %v522, 0
      %v544 = vsel %vm197, %v538, 0
      %v547 = vsel %vm197, %v539, 0
      %v550 = vsel %vm197, %v536, 0
      %552 = vmatpush.bf16.msra.mxu0 0
      %553 = vmatpush.bf16.msra.mxu0 0
      %554 = vmatpush.bf16.msra.mxu0 0
      %555 = vmatpush.bf16.msra.mxu0 0
      %556 = vmatpush.bf16.msra.mxu0 0
      %557 = vmatpush.bf16.msra.mxu0 0
      %558 = vmatpush.bf16.msra.mxu0 0
      %559 = vmatpush.bf16.msra.mxu0 %v544
      %560 = vmatmul.bf16.gmra.mxu0 %v541
      %v561 = vpop.f32.mrf.mxu0
      %v562 = vadd.f32 0.0, %v561
      %v563 = vpop.f32.mrf.mxu0
      %564 = vdwg.mxu0
      %565 = vmatpush.bf16.msra.mxu0 0
      %566 = vmatpush.bf16.msra.mxu0 0
      %567 = vmatpush.bf16.msra.mxu0 0
      %568 = vmatpush.bf16.msra.mxu0 0
      %569 = vmatpush.bf16.msra.mxu0 0
      %570 = vmatpush.bf16.msra.mxu0 0
      %571 = vmatpush.bf16.msra.mxu0 0
      %572 = vmatpush.bf16.msra.mxu0 %v547
      %573 = vmatmul.bf16.gmra.mxu0 %v541
      %v574 = vpop.f32.mrf.mxu0
      %v575 = vadd.f32 0.0, %v574
      %v576 = vpop.f32.mrf.mxu0
      %577 = vdwg.mxu0
      %578 = vmatpush.bf16.msra.mxu0 0
      %579 = vmatpush.bf16.msra.mxu0 0
      %580 = vmatpush.bf16.msra.mxu0 0
      %581 = vmatpush.bf16.msra.mxu0 0
      %582 = vmatpush.bf16.msra.mxu0 0
      %583 = vmatpush.bf16.msra.mxu0 0
      %584 = vmatpush.bf16.msra.mxu0 0
      %585 = vmatpush.bf16.msra.mxu0 %v550
      %586 = vmatmul.bf16.gmra.mxu0 %v541
      %v587 = vpop.f32.mrf.mxu0
      %v588 = vadd.f32 0.0, %v587
      %v589 = vpop.f32.mrf.mxu0
      %590 = vdwg.mxu0
      %v591 = vadd.f32 %v517, %v562
      %v592 = vadd.f32 %v518, %v575
      %v593 = vadd.f32 %v519, %v588
      %v594 = vld [vmem:[%s165] sm:$0x3f]
      %s595 = scalar_lea.vmem %s0, 12
      %v596 = vld [vmem:[%s595] sm:$0x3]
      %598 = vst [vmem:[#allocation1] ss:$4 sm:$0xff] %v594
      %v599 = vld.sshfl [vmem:[#allocation1] sm:$0xff pattern:$0x73625140]
      %v601 = vld.sshfl [vmem:[#allocation1 + $0x8] sm:$0xff pattern:$0x73625140]
      %v603 = vld.sshfl [vmem:[#allocation1 + $0x10] sm:$0xff pattern:$0x73625140]
      %605 = vrot.lane.b32.xlu0 %v599, 92
      %v606 = vpop.permute.xlu0 %605
      %607 = vrot.lane.b32.xlu0 %v601, 92
      %v608 = vpop.permute.xlu0 %607
      %609 = vrot.lane.b32.xlu0 %v603, 92
      %v610 = vpop.permute.xlu0 %609
      %vm611 = vcmask 752640
      %v612 = vsel %vm611, %v606, %v608
      %v613 = vsel %vm611, %v608, %v610
      %v615 = vsel %vm193, %v596, 0
      %v618 = vsel %vm197, %v612, 0
      %v621 = vsel %vm197, %v613, 0
      %v624 = vsel %vm197, %v610, 0
      %626 = vmatpush.bf16.msra.mxu0 0
      %627 = vmatpush.bf16.msra.mxu0 0
      %628 = vmatpush.bf16.msra.mxu0 0
      %629 = vmatpush.bf16.msra.mxu0 0
      %630 = vmatpush.bf16.msra.mxu0 0
      %631 = vmatpush.bf16.msra.mxu0 0
      %632 = vmatpush.bf16.msra.mxu0 0
      %633 = vmatpush.bf16.msra.mxu0 %v618
      %634 = vmatmul.bf16.gmra.mxu0 %v615
      %v635 = vpop.f32.mrf.mxu0
      %v636 = vadd.f32 0.0, %v635
      %v637 = vpop.f32.mrf.mxu0
      %638 = vdwg.mxu0
      %639 = vmatpush.bf16.msra.mxu0 0
      %640 = vmatpush.bf16.msra.mxu0 0
      %641 = vmatpush.bf16.msra.mxu0 0
      %642 = vmatpush.bf16.msra.mxu0 0
      %643 = vmatpush.bf16.msra.mxu0 0
      %644 = vmatpush.bf16.msra.mxu0 0
      %645 = vmatpush.bf16.msra.mxu0 0
      %646 = vmatpush.bf16.msra.mxu0 %v621
      %647 = vmatmul.bf16.gmra.mxu0 %v615
      %v648 = vpop.f32.mrf.mxu0
      %v649 = vadd.f32 0.0, %v648
      %v650 = vpop.f32.mrf.mxu0
      %651 = vdwg.mxu0
      %652 = vmatpush.bf16.msra.mxu0 0
      %653 = vmatpush.bf16.msra.mxu0 0
      %654 = vmatpush.bf16.msra.mxu0 0
      %655 = vmatpush.bf16.msra.mxu0 0
      %656 = vmatpush.bf16.msra.mxu0 0
      %657 = vmatpush.bf16.msra.mxu0 0
      %658 = vmatpush.bf16.msra.mxu0 0
      %659 = vmatpush.bf16.msra.mxu0 %v624
      %660 = vmatmul.bf16.gmra.mxu0 %v615
      %v661 = vpop.f32.mrf.mxu0
      %v662 = vadd.f32 0.0, %v661
      %v663 = vpop.f32.mrf.mxu0
      %664 = vdwg.mxu0
      %v665 = vadd.f32 %v591, %v636
      %v666 = vadd.f32 %v592, %v649
      %v667 = vadd.f32 %v593, %v662
      %v668 = vld [vmem:[%s165] sm:$0x3f]
      %s669 = scalar_lea.vmem %s0, 14
      %v670 = vld [vmem:[%s669] sm:$0x3]
      %672 = vst [vmem:[#allocation1] ss:$4 sm:$0xff] %v668
      %v673 = vld.sshfl [vmem:[#allocation1] sm:$0xff pattern:$0x73625140]
      %v675 = vld.sshfl [vmem:[#allocation1 + $0x8] sm:$0xff pattern:$0x73625140]
      %v677 = vld.sshfl [vmem:[#allocation1 + $0x10] sm:$0xff pattern:$0x73625140]
      %679 = vrot.lane.b32.xlu0 %v673, 91
      %v680 = vpop.permute.xlu0 %679
      %681 = vrot.lane.b32.xlu0 %v675, 91
      %v682 = vpop.permute.xlu0 %681
      %683 = vrot.lane.b32.xlu0 %v677, 91
      %v684 = vpop.permute.xlu0 %683
      %vm685 = vcmask 744448
      %v686 = vsel %vm685, %v680, %v682
      %v687 = vsel %vm685, %v682, %v684
      %v689 = vsel %vm193, %v670, 0
      %v692 = vsel %vm197, %v686, 0
      %v695 = vsel %vm197, %v687, 0
      %v698 = vsel %vm197, %v684, 0
      %700 = vmatpush.bf16.msra.mxu0 0
      %701 = vmatpush.bf16.msra.mxu0 0
      %702 = vmatpush.bf16.msra.mxu0 0
      %703 = vmatpush.bf16.msra.mxu0 0
      %704 = vmatpush.bf16.msra.mxu0 0
      %705 = vmatpush.bf16.msra.mxu0 0
      %706 = vmatpush.bf16.msra.mxu0 0
      %707 = vmatpush.bf16.msra.mxu0 %v692
      %708 = vmatmul.bf16.gmra.mxu0 %v689
      %v709 = vpop.f32.mrf.mxu0
      %v710 = vadd.f32 0.0, %v709
      %v711 = vpop.f32.mrf.mxu0
      %712 = vdwg.mxu0
      %713 = vmatpush.bf16.msra.mxu0 0
      %714 = vmatpush.bf16.msra.mxu0 0
      %715 = vmatpush.bf16.msra.mxu0 0
      %716 = vmatpush.bf16.msra.mxu0 0
      %717 = vmatpush.bf16.msra.mxu0 0
      %718 = vmatpush.bf16.msra.mxu0 0
      %719 = vmatpush.bf16.msra.mxu0 0
      %720 = vmatpush.bf16.msra.mxu0 %v695
      %721 = vmatmul.bf16.gmra.mxu0 %v689
      %v722 = vpop.f32.mrf.mxu0
      %v723 = vadd.f32 0.0, %v722
      %v724 = vpop.f32.mrf.mxu0
      %725 = vdwg.mxu0
      %726 = vmatpush.bf16.msra.mxu0 0
      %727 = vmatpush.bf16.msra.mxu0 0
      %728 = vmatpush.bf16.msra.mxu0 0
      %729 = vmatpush.bf16.msra.mxu0 0
      %730 = vmatpush.bf16.msra.mxu0 0
      %731 = vmatpush.bf16.msra.mxu0 0
      %732 = vmatpush.bf16.msra.mxu0 0
      %733 = vmatpush.bf16.msra.mxu0 %v698
      %734 = vmatmul.bf16.gmra.mxu0 %v689
      %v735 = vpop.f32.mrf.mxu0
      %v736 = vadd.f32 0.0, %v735
      %v737 = vpop.f32.mrf.mxu0
      %738 = vdwg.mxu0
      %v739 = vadd.f32 %v665, %v710
      %v740 = vadd.f32 %v666, %v723
      %v741 = vadd.f32 %v667, %v736
      %v742 = vld [vmem:[%s165] sm:$0x3f]
      %s743 = scalar_lea.vmem %s0, 16
      %v744 = vld [vmem:[%s743] sm:$0x3]
      %746 = vst [vmem:[#allocation1] ss:$4 sm:$0xff] %v742
      %v747 = vld.sshfl [vmem:[#allocation1] sm:$0xff pattern:$0x73625140]
      %v749 = vld.sshfl [vmem:[#allocation1 + $0x8] sm:$0xff pattern:$0x73625140]
      %v751 = vld.sshfl [vmem:[#allocation1 + $0x10] sm:$0xff pattern:$0x73625140]
      %753 = vrot.lane.b32.xlu0 %v747, 90
      %v754 = vpop.permute.xlu0 %753
      %755 = vrot.lane.b32.xlu0 %v749, 90
      %v756 = vpop.permute.xlu0 %755
      %757 = vrot.lane.b32.xlu0 %v751, 90
      %v758 = vpop.permute.xlu0 %757
      %vm759 = vcmask 736256
      %v760 = vsel %vm759, %v754, %v756
      %v761 = vsel %vm759, %v756, %v758
      %v763 = vsel %vm193, %v744, 0
      %v766 = vsel %vm197, %v760, 0
      %v769 = vsel %vm197, %v761, 0
      %v772 = vsel %vm197, %v758, 0
      %774 = vmatpush.bf16.msra.mxu0 0
      %775 = vmatpush.bf16.msra.mxu0 0
      %776 = vmatpush.bf16.msra.mxu0 0
      %777 = vmatpush.bf16.msra.mxu0 0
      %778 = vmatpush.bf16.msra.mxu0 0
      %779 = vmatpush.bf16.msra.mxu0 0
      %780 = vmatpush.bf16.msra.mxu0 0
      %781 = vmatpush.bf16.msra.mxu0 %v766
      %782 = vmatmul.bf16.gmra.mxu0 %v763
      %v783 = vpop.f32.mrf.mxu0
      %v784 = vadd.f32 0.0, %v783
      %v785 = vpop.f32.mrf.mxu0
      %786 = vdwg.mxu0
      %787 = vmatpush.bf16.msra.mxu0 0
      %788 = vmatpush.bf16.msra.mxu0 0
      %789 = vmatpush.bf16.msra.mxu0 0
      %790 = vmatpush.bf16.msra.mxu0 0
      %791 = vmatpush.bf16.msra.mxu0 0
      %792 = vmatpush.bf16.msra.mxu0 0
      %793 = vmatpush.bf16.msra.mxu0 0
      %794 = vmatpush.bf16.msra.mxu0 %v769
      %795 = vmatmul.bf16.gmra.mxu0 %v763
      %v796 = vpop.f32.mrf.mxu0
      %v797 = vadd.f32 0.0, %v796
      %v798 = vpop.f32.mrf.mxu0
      %799 = vdwg.mxu0
      %800 = vmatpush.bf16.msra.mxu0 0
      %801 = vmatpush.bf16.msra.mxu0 0
      %802 = vmatpush.bf16.msra.mxu0 0
      %803 = vmatpush.bf16.msra.mxu0 0
      %804 = vmatpush.bf16.msra.mxu0 0
      %805 = vmatpush.bf16.msra.mxu0 0
      %806 = vmatpush.bf16.msra.mxu0 0
      %807 = vmatpush.bf16.msra.mxu0 %v772
      %808 = vmatmul.bf16.gmra.mxu0 %v763
      %v809 = vpop.f32.mrf.mxu0
      %v810 = vadd.f32 0.0, %v809
      %v811 = vpop.f32.mrf.mxu0
      %812 = vdwg.mxu0
      %v813 = vadd.f32 %v739, %v784
      %v814 = vadd.f32 %v740, %v797
      %v815 = vadd.f32 %v741, %v810
      %v816 = vld [vmem:[%s1] sm:$0xf]
      %818 = vset.pattern.permute.xlu0 0
      %819 = vperm.xlu0 %818, %v816
      %v820 = vpop.permute.xlu0 %819
      %v822 = vadd.f32 %v813, %v820
      %v823 = vadd.f32 %v814, %v820
      %v824 = vadd.f32 %v815, %v820
      %v825 = vmax.f32 %v822, 0.0
      %v826 = vmax.f32 %v823, 0.0
      %v827 = vmax.f32 %v824, 0.0
      %v828 = vpack.c.bf16 %v826, %v825
      %v829 = vpack.c.bf16 %v827, %v827
      %v832 = vrot.slane %v828, 2
      %v833 = vrot.slane %v829, 4
      %v834 = vrot.slane %v829, 6
      %v837 = vsel %vm197, %v828, %v832
      %vm838 = vcmask 1045508
      %v841 = vsel %vm838, %v833, %v834
      %vm842 = vcmask 1043456
      %v843 = vsel %vm842, %v837, %v841
      %vm845 = vcmask 1043458
      %vm846 = vmor %vm845, %vm197
      %vm847 = vcmask 259076
      %vm848 = vmor %vm847, %vm846
      %849 = vst.msk [vmem:[%s170] sm:$0x3f] %vm848, %v843
      %p850 = scmp.lt.s32.totalorder %s14, 1
      %s851 = scalar_select %p850, %s14, 1
      %s852 = smul.addr %s851, 3
      %s853 = smul.addr %s852, 2
      %s854 = scalar_lea.vmem %s3, %s853
      // Predicated region
      $region33: #{a_call__.4} parent=31 // pred_check
        %p855 = pneg %p100
      $region34: #{a_call__.4} parent=31 // pred_check_branch
        %857 = sbr.rel (%p855) target = $region36
      $region35: #{a_call__.4} parent=31 // pred_region
        _
      $region36: #{a_call__.4} parent=31 // pred_fallthru
        _
    $region32: #{a_call__.4} parent=5 // pred_fallthru
      _
    %p858 = scmp.le.s32.totalorder 2, %s9
    // Predicated region
    $region37: #{a_call__.4} parent=5 // pred_check
      %p859 = pneg %p858
    $region38: #{a_call__.4} parent=5 // pred_check_branch
      %861 = sbr.rel (%p859) target = $region40
    $region39: #{a_call__.4} parent=5 // pred_region
      %s862 = ssub.s32 %s9, 2
      // Predicated region
      $region41: #{a_call__.4} parent=39 // pred_check
        %p863 = pneg %p106
      $region42: #{a_call__.4} parent=39 // pred_check_branch
        %865 = sbr.rel (%p863) target = $region44
      $region43: #{a_call__.4} parent=39 // pred_region
        %p866 = scmp.lt.s32.totalorder %s15, 1
        %s867 = scalar_select %p866, %s15, 1
        %s868 = smul.addr %s867, 3
        %s869 = smul.addr %s868, 2
        %s870 = scalar_lea.vmem %s3, %s869
      $region44: #{a_call__.4} parent=39 // pred_fallthru
        _
    $region40: #{a_call__.4} parent=5 // pred_fallthru
      _
  $region6: #{a_call__.4} parent=0 // loop_footer
    %s13 = sadd.s32 1, %s9
  $region7: #{a_call__.4} parent=0 // loop_footer_branch
    %8 = sbr.rel target = $region3
  $region8: #{a_call__.4} parent=0 // loop_exit
    _

// kernel: a_call__.5
$region0: #{a_call__.5}
  #allocation0 [shape = 'u32[]', space=smem, size = 0x4, offset = 0x4, fixed_abs, tag = 'smem constant byte address 0x4 - core index']
  #allocation1 [shape = 'u32[72,128]{1,0:T(1,128)}', space=vmem, size = 0x9000, scoped, tag = 'internal scratch']
  %s0 = inlined_call_operand.vmem [shape: bf16[9,4,4], index: 0, kind: input, shape index: {}]
  %s1 = inlined_call_operand.vmem [shape: f32[4,1], index: 1, kind: input, shape index: {}]
  %s2 = inlined_call_operand.vmem [shape: bf16[2,4,326], index: 2, kind: input, shape index: {}]
  %s3 = inlined_call_operand.vmem [shape: bf16[2,4,288], index: 3, kind: input, shape index: {}]
  %s4 = inlined_call_operand.vmem [shape: f32[2,4,288], index: 4, kind: output, shape index: {}]
  %s5 = sld [smem:[#allocation0]]
  $region49: #{a_call__.5} parent=0
    _
  %s7 = ssub.s32 1, %s5
  %s8 = scalar_select 0, %s7, %s5
  loop: start=0, step=1, limit=4
  $region2: #{a_call__.5} parent=0 // loop_pre_header
    _
  $region3: #{a_call__.5} parent=0 // loop_header
    %s10 = sphi 0, %s14
    %p11 = scmp.ge.s32.totalorder %s10, 4
    %s18 = sphi 0, %s18
    %s20 = sphi 0, %s18
    %s21 = sphi 0, %s20
    %s35 = sphi 0, %s21
    %s39 = sphi 0, %s39
    %s41 = sphi 0, %s39
    %s42 = sphi 0, %s41
    %s56 = sphi 0, %s42
    %s62 = sphi 0, %s64
    %s65 = sphi 0, %s62
    %s66 = sphi 0, %s65
    %s82 = sphi 0, %s66
    %s88 = sphi 0, %s90
    %s91 = sphi 0, %s88
    %s92 = sphi 0, %s91
    %s108 = sphi 0, %s92
    %s114 = sphi 0, %s116
    %s117 = sphi 0, %s114
    %s118 = sphi 0, %s117
    %s134 = sphi 0, %s118
  $region4: #{a_call__.5} parent=0 // loop_header_branch
    %13 = sbr.rel (%p11) target = $region8
  $region5: #{a_call__.5} parent=0 // loop_body
    %s15 = ssub.s32 %s10, 1
    %s16 = ssub.s32 %s10, 2
    %s17 = sadd.s32 %s10, 1
    %s19 = sadd.s32 %s18, 1
    %p22 = scmp.eq.s32.totalorder %s10, 1
    %p23 = scmp.ne.s32.totalorder %s18, %s20
    %p24 = scmp.eq.s32.totalorder %s10, 0
    %p25 = por %p23, %p24
    %p26 = scmp.ne.s32.totalorder %s18, %s20
    %p27 = scmp.eq.s32.totalorder %s15, 1
    %p28 = por %p26, %p27
    %p29 = scmp.ne.s32.totalorder %s20, %s21
    %p30 = scmp.eq.s32.totalorder %s15, 0
    %p31 = por %p29, %p30
    %p32 = scmp.ne.s32.totalorder %s20, %s21
    %p33 = scmp.eq.s32.totalorder %s16, 1
    %p34 = por %p32, %p33
    %p36 = scmp.ne.s32.totalorder %s21, %s35
    %p37 = scmp.eq.s32.totalorder %s16, 0
    %p38 = por %p36, %p37
    %s40 = sadd.s32 %s39, 1
    %p43 = scmp.eq.s32.totalorder %s10, 1
    %p44 = scmp.ne.s32.totalorder %s39, %s41
    %p45 = scmp.eq.s32.totalorder %s10, 0
    %p46 = por %p44, %p45
    %p47 = scmp.ne.s32.totalorder %s39, %s41
    %p48 = scmp.eq.s32.totalorder %s15, 1
    %p49 = por %p47, %p48
    %p50 = scmp.ne.s32.totalorder %s41, %s42
    %p51 = scmp.eq.s32.totalorder %s15, 0
    %p52 = por %p50, %p51
    %p53 = scmp.ne.s32.totalorder %s41, %s42
    %p54 = scmp.eq.s32.totalorder %s16, 1
    %p55 = por %p53, %p54
    %p57 = scmp.ne.s32.totalorder %s42, %s56
    %p58 = scmp.eq.s32.totalorder %s16, 0
    %p59 = por %p57, %p58
    %s60 = ssub.s32 %s10, %s17
    %p61 = scmp.eq.s32.totalorder %s60, 0
    %s63 = sadd.s32 %s62, 1
    %s64 = scalar_select %p61, %s62, %s63
    %p67 = pneg %p61
    %p68 = scmp.eq.s32.totalorder %s10, 1
    %p69 = por %p67, %p68
    %p70 = scmp.ne.s32.totalorder %s62, %s65
    %p71 = scmp.eq.s32.totalorder %s10, 0
    %p72 = por %p70, %p71
    %p73 = scmp.ne.s32.totalorder %s62, %s65
    %p74 = scmp.eq.s32.totalorder %s15, 1
    %p75 = por %p73, %p74
    %p76 = scmp.ne.s32.totalorder %s65, %s66
    %p77 = scmp.eq.s32.totalorder %s15, 0
    %p78 = por %p76, %p77
    %p79 = scmp.ne.s32.totalorder %s65, %s66
    %p80 = scmp.eq.s32.totalorder %s16, 1
    %p81 = por %p79, %p80
    %p83 = scmp.ne.s32.totalorder %s66, %s82
    %p84 = scmp.eq.s32.totalorder %s16, 0
    %p85 = por %p83, %p84
    %s86 = ssub.s32 %s10, %s17
    %p87 = scmp.eq.s32.totalorder %s86, 0
    %s89 = sadd.s32 %s88, 1
    %s90 = scalar_select %p87, %s88, %s89
    %p93 = pneg %p87
    %p94 = scmp.eq.s32.totalorder %s10, 1
    %p95 = por %p93, %p94
    %p96 = scmp.ne.s32.totalorder %s88, %s91
    %p97 = scmp.eq.s32.totalorder %s10, 0
    %p98 = por %p96, %p97
    %p99 = scmp.ne.s32.totalorder %s88, %s91
    %p100 = scmp.eq.s32.totalorder %s15, 1
    %p101 = por %p99, %p100
    %p102 = scmp.ne.s32.totalorder %s91, %s92
    %p103 = scmp.eq.s32.totalorder %s15, 0
    %p104 = por %p102, %p103
    %p105 = scmp.ne.s32.totalorder %s91, %s92
    %p106 = scmp.eq.s32.totalorder %s16, 1
    %p107 = por %p105, %p106
    %p109 = scmp.ne.s32.totalorder %s92, %s108
    %p110 = scmp.eq.s32.totalorder %s16, 0
    %p111 = por %p109, %p110
    %s112 = ssub.s32 %s10, %s17
    %p113 = scmp.eq.s32.totalorder %s112, 0
    %s115 = sadd.s32 %s114, 1
    %s116 = scalar_select %p113, %s114, %s115
    %p119 = pneg %p113
    %p120 = scmp.eq.s32.totalorder %s10, 1
    %p121 = por %p119, %p120
    %p122 = scmp.ne.s32.totalorder %s114, %s117
    %p123 = scmp.eq.s32.totalorder %s10, 0
    %p124 = por %p122, %p123
    %p125 = scmp.ne.s32.totalorder %s114, %s117
    %p126 = scmp.eq.s32.totalorder %s15, 1
    %p127 = por %p125, %p126
    %p128 = scmp.ne.s32.totalorder %s117, %s118
    %p129 = scmp.eq.s32.totalorder %s15, 0
    %p130 = por %p128, %p129
    %p131 = scmp.ne.s32.totalorder %s117, %s118
    %p132 = scmp.eq.s32.totalorder %s16, 1
    %p133 = por %p131, %p132
    %p135 = scmp.ne.s32.totalorder %s118, %s134
    %p136 = scmp.eq.s32.totalorder %s16, 0
    %p137 = por %p135, %p136
    %p138 = scmp.le.s32.totalorder 1, %s10
    %p139 = scmp.lt.s32.totalorder %s10, 3
    %p140 = pnand %p138, %p139
    %p141 = pneg %p140
    // Predicated region
    $region9: #{a_call__.5} parent=5 // pred_check
      _
    $region10: #{a_call__.5} parent=5 // pred_check_branch
      %143 = sbr.rel (%p140) target = $region12
    $region11: #{a_call__.5} parent=5 // pred_region
      %s144 = ssub.s32 %s10, 1
      // Predicated region
      $region13: #{a_call__.5} parent=11 // pred_check
        %p145 = pneg %p31
      $region14: #{a_call__.5} parent=11 // pred_check_branch
        %147 = sbr.rel (%p145) target = $region16
      $region15: #{a_call__.5} parent=11 // pred_region
        _
      $region16: #{a_call__.5} parent=11 // pred_fallthru
        _
      // Predicated region
      $region17: #{a_call__.5} parent=11 // pred_check
        %p148 = pneg %p52
      $region18: #{a_call__.5} parent=11 // pred_check_branch
        %150 = sbr.rel (%p148) target = $region20
      $region19: #{a_call__.5} parent=11 // pred_region
        _
      $region20: #{a_call__.5} parent=11 // pred_fallthru
        _
    $region12: #{a_call__.5} parent=5 // pred_fallthru
      _
    %p151 = scmp.lt.s32.totalorder %s10, 2
    // Predicated region
    $region21: #{a_call__.5} parent=5 // pred_check
      %p152 = pneg %p151
    $region22: #{a_call__.5} parent=5 // pred_check_branch
      %154 = sbr.rel (%p152) target = $region24
    $region23: #{a_call__.5} parent=5 // pred_region
      // Predicated region
      $region25: #{a_call__.5} parent=23 // pred_check
        %p155 = pneg %p72
      $region26: #{a_call__.5} parent=23 // pred_check_branch
        %157 = sbr.rel (%p155) target = $region28
      $region27: #{a_call__.5} parent=23 // pred_region
        %p158 = scmp.lt.s32.totalorder %s10, 1
        %s159 = scalar_select %p158, %s10, 1
        %s160 = smul.addr %s159, 3
        %s161 = smul.addr %s160, 2
        %s162 = scalar_lea.vmem %s2, %s161
      $region28: #{a_call__.5} parent=23 // pred_fallthru
        _
      // Predicated region
      $region29: #{a_call__.5} parent=23 // pred_check
        %p163 = pneg %p98
      $region30: #{a_call__.5} parent=23 // pred_check_branch
        %165 = sbr.rel (%p163) target = $region32
      $region31: #{a_call__.5} parent=23 // pred_region
        %p166 = scmp.lt.s32.totalorder %s10, 1
        %s167 = scalar_select %p166, %s10, 1
        %s168 = smul.addr %s167, 3
        %s169 = smul.addr %s168, 2
        %s170 = scalar_lea.vmem %s3, %s169
      $region32: #{a_call__.5} parent=23 // pred_fallthru
        _
    $region24: #{a_call__.5} parent=5 // pred_fallthru
      _
    %p171 = scmp.le.s32.totalorder 1, %s10
    %p172 = scmp.lt.s32.totalorder %s10, 3
    %p173 = pnand %p171, %p172
    %p174 = pneg %p173
    // Predicated region
    $region33: #{a_call__.5} parent=5 // pred_check
      _
    $region34: #{a_call__.5} parent=5 // pred_check_branch
      %176 = sbr.rel (%p173) target = $region36
    $region35: #{a_call__.5} parent=5 // pred_region
      %s177 = ssub.s32 %s10, 1
      %p178 = pneg %p31
      %p179 = pneg %p28
      %p180 = pneg %p52
      %p181 = pneg %p49
      %p182 = scmp.lt.s32.totalorder %s15, 1
      %s183 = scalar_select %p182, %s15, 1
      %s184 = smul.addr %s183, 3
      %s185 = smul.addr %s184, 2
      %s186 = scalar_lea.vmem %s2, %s185
      %p187 = pneg %p78
      %p188 = pneg %p75
      %p189 = scmp.lt.s32.totalorder %s15, 1
      %s190 = scalar_select %p189, %s15, 1
      %s191 = smul.addr %s190, 3
      %s192 = smul.addr %s191, 2
      %s193 = scalar_lea.vmem %s3, %s192
      %p194 = pneg %p104
      %p195 = pneg %p101
      %p196 = pneg %p130
      %p197 = pneg %p127
      %p198 = scmp.lt.s32.totalorder %s15, 1
      %s199 = scalar_select %p198, %s15, 1
      %s200 = smul.addr %s199, 3
      %s201 = smul.addr %s200, 4
      %s202 = scalar_lea.vmem %s4, %s201
      %p203 = scmp.lt.s32.totalorder %s15, 1
      %s204 = scalar_select %p203, %s15, 1
      %s205 = smul.addr %s204, 3
      %s206 = smul.addr %s205, 2
      %s207 = scalar_lea.vmem %s2, %s206
      %p208 = scmp.lt.s32.totalorder %s15, 1
      %s209 = scalar_select %p208, %s15, 1
      %s210 = smul.addr %s209, 3
      %s211 = smul.addr %s210, 2
      %s212 = scalar_lea.vmem %s3, %s211
      %p213 = scmp.lt.s32.totalorder %s15, 1
      %s214 = scalar_select %p213, %s15, 1
      %s215 = smul.addr %s214, 3
      %s216 = smul.addr %s215, 4
      %s217 = scalar_lea.vmem %s4, %s216
      %v219 = vld [vmem:[%s207] sm:$0x3f]
      %v220 = vld [vmem:[%s0] sm:$0x3]
      %s221 = scalar_lea.vmem %s0, 2
      %v222 = vld [vmem:[%s221] sm:$0x3]
      %224 = vst [vmem:[#allocation1] ss:$4 sm:$0xff] %v219
      %v225 = vld.sshfl [vmem:[#allocation1] sm:$0xff pattern:$0x73625140]
      %v227 = vld.sshfl [vmem:[#allocation1 + $0x8] sm:$0xff pattern:$0x73625140]
      %v229 = vld.sshfl [vmem:[#allocation1 + $0x10] sm:$0xff pattern:$0x73625140]
      %231 = vrot.lane.b32.xlu0 %v225, 127
      %v232 = vpop.permute.xlu0 %231
      %233 = vrot.lane.b32.xlu0 %v227, 127
      %v234 = vpop.permute.xlu0 %233
      %235 = vrot.lane.b32.xlu0 %v229, 127
      %v236 = vpop.permute.xlu0 %235
      %vm237 = vcmask 1039360
      %v238 = vsel %vm237, %v232, %v234
      %v239 = vsel %vm237, %v234, %v236
      %vm240 = vcmask 31744
      %v242 = vsel %vm240, %v222, 0
      %vm244 = vcmask 1041408
      %v246 = vsel %vm244, %v238, 0
      %v249 = vsel %vm244, %v239, 0
      %v252 = vsel %vm244, %v236, 0
      %254 = vmatpush.bf16.msra.mxu0 0
      %255 = vmatpush.bf16.msra.mxu0 0
      %256 = vmatpush.bf16.msra.mxu0 0
      %257 = vmatpush.bf16.msra.mxu0 0
      %258 = vmatpush.bf16.msra.mxu0 0
      %259 = vmatpush.bf16.msra.mxu0 0
      %260 = vmatpush.bf16.msra.mxu0 0
      %261 = vmatpush.bf16.msra.mxu0 %v246
      %262 = vmatmul.bf16.gmra.mxu0 %v242
      %v263 = vpop.f32.mrf.mxu0
      %v264 = vadd.f32 0.0, %v263
      %v265 = vpop.f32.mrf.mxu0
      %266 = vdwg.mxu0
      %267 = vmatpush.bf16.msra.mxu0 0
      %268 = vmatpush.bf16.msra.mxu0 0
      %269 = vmatpush.bf16.msra.mxu0 0
      %270 = vmatpush.bf16.msra.mxu0 0
      %271 = vmatpush.bf16.msra.mxu0 0
      %272 = vmatpush.bf16.msra.mxu0 0
      %273 = vmatpush.bf16.msra.mxu0 0
      %274 = vmatpush.bf16.msra.mxu0 %v249
      %275 = vmatmul.bf16.gmra.mxu0 %v242
      %v276 = vpop.f32.mrf.mxu0
      %v277 = vadd.f32 0.0, %v276
      %v278 = vpop.f32.mrf.mxu0
      %279 = vdwg.mxu0
      %280 = vmatpush.bf16.msra.mxu0 0
      %281 = vmatpush.bf16.msra.mxu0 0
      %282 = vmatpush.bf16.msra.mxu0 0
      %283 = vmatpush.bf16.msra.mxu0 0
      %284 = vmatpush.bf16.msra.mxu0 0
      %285 = vmatpush.bf16.msra.mxu0 0
      %286 = vmatpush.bf16.msra.mxu0 0
      %287 = vmatpush.bf16.msra.mxu0 %v252
      %288 = vmatmul.bf16.gmra.mxu0 %v242
      %v289 = vpop.f32.mrf.mxu0
      %v290 = vadd.f32 0.0, %v289
      %v291 = vpop.f32.mrf.mxu0
      %292 = vdwg.mxu0
      %293 = vst [vmem:[#allocation1] ss:$4 sm:$0xff] %v219
      %v294 = vld.sshfl [vmem:[#allocation1] sm:$0xff pattern:$0x73625140]
      %v295 = vld.sshfl [vmem:[#allocation1 + $0x8] sm:$0xff pattern:$0x73625140]
      %v296 = vld.sshfl [vmem:[#allocation1 + $0x10] sm:$0xff pattern:$0x73625140]
      %v298 = vsel %vm240, %v220, 0
      %v300 = vsel %vm244, %v294, 0
      %v302 = vsel %vm244, %v295, 0
      %v304 = vsel %vm244, %v296, 0
      %306 = vmatpush.bf16.msra.mxu0 0
      %307 = vmatpush.bf16.msra.mxu0 0
      %308 = vmatpush.bf16.msra.mxu0 0
      %309 = vmatpush.bf16.msra.mxu0 0
      %310 = vmatpush.bf16.msra.mxu0 0
      %311 = vmatpush.bf16.msra.mxu0 0
      %312 = vmatpush.bf16.msra.mxu0 0
      %313 = vmatpush.bf16.msra.mxu0 %v300
      %314 = vmatmul.bf16.gmra.mxu0 %v298
      %v315 = vpop.f32.mrf.mxu0
      %v316 = vadd.f32 %v264, %v315
      %v317 = vpop.f32.mrf.mxu0
      %318 = vdwg.mxu0
      %319 = vmatpush.bf16.msra.mxu0 0
      %320 = vmatpush.bf16.msra.mxu0 0
      %321 = vmatpush.bf16.msra.mxu0 0
      %322 = vmatpush.bf16.msra.mxu0 0
      %323 = vmatpush.bf16.msra.mxu0 0
      %324 = vmatpush.bf16.msra.mxu0 0
      %325 = vmatpush.bf16.msra.mxu0 0
      %326 = vmatpush.bf16.msra.mxu0 %v302
      %327 = vmatmul.bf16.gmra.mxu0 %v298
      %v328 = vpop.f32.mrf.mxu0
      %v329 = vadd.f32 %v277, %v328
      %v330 = vpop.f32.mrf.mxu0
      %331 = vdwg.mxu0
      %332 = vmatpush.bf16.msra.mxu0 0
      %333 = vmatpush.bf16.msra.mxu0 0
      %334 = vmatpush.bf16.msra.mxu0 0
      %335 = vmatpush.bf16.msra.mxu0 0
      %336 = vmatpush.bf16.msra.mxu0 0
      %337 = vmatpush.bf16.msra.mxu0 0
      %338 = vmatpush.bf16.msra.mxu0 0
      %339 = vmatpush.bf16.msra.mxu0 %v304
      %340 = vmatmul.bf16.gmra.mxu0 %v298
      %v341 = vpop.f32.mrf.mxu0
      %v342 = vadd.f32 %v290, %v341
      %v343 = vpop.f32.mrf.mxu0
      %344 = vdwg.mxu0
      %v345 = vld [vmem:[%s207] sm:$0x3f]
      %s346 = scalar_lea.vmem %s0, 4
      %v347 = vld [vmem:[%s346] sm:$0x3]
      %349 = vst [vmem:[#allocation1] ss:$4 sm:$0xff] %v345
      %v350 = vld.sshfl [vmem:[#allocation1] sm:$0xff pattern:$0x73625140]
      %v352 = vld.sshfl [vmem:[#allocation1 + $0x8] sm:$0xff pattern:$0x73625140]
      %v354 = vld.sshfl [vmem:[#allocation1 + $0x10] sm:$0xff pattern:$0x73625140]
      %356 = vrot.lane.b32.xlu0 %v350, 126
      %v357 = vpop.permute.xlu0 %356
      %358 = vrot.lane.b32.xlu0 %v352, 126
      %v359 = vpop.permute.xlu0 %358
      %360 = vrot.lane.b32.xlu0 %v354, 126
      %v361 = vpop.permute.xlu0 %360
      %vm362 = vcmask 1031168
      %v363 = vsel %vm362, %v357, %v359
      %v364 = vsel %vm362, %v359, %v361
      %v366 = vsel %vm240, %v347, 0
      %v369 = vsel %vm244, %v363, 0
      %v372 = vsel %vm244, %v364, 0
      %v375 = vsel %vm244, %v361, 0
      %377 = vmatpush.bf16.msra.mxu0 0
      %378 = vmatpush.bf16.msra.mxu0 0
      %379 = vmatpush.bf16.msra.mxu0 0
      %380 = vmatpush.bf16.msra.mxu0 0
      %381 = vmatpush.bf16.msra.mxu0 0
      %382 = vmatpush.bf16.msra.mxu0 0
      %383 = vmatpush.bf16.msra.mxu0 0
      %384 = vmatpush.bf16.msra.mxu0 %v369
      %385 = vmatmul.bf16.gmra.mxu0 %v366
      %v386 = vpop.f32.mrf.mxu0
      %v387 = vadd.f32 0.0, %v386
      %v388 = vpop.f32.mrf.mxu0
      %389 = vdwg.mxu0
      %390 = vmatpush.bf16.msra.mxu0 0
      %391 = vmatpush.bf16.msra.mxu0 0
      %392 = vmatpush.bf16.msra.mxu0 0
      %393 = vmatpush.bf16.msra.mxu0 0
      %394 = vmatpush.bf16.msra.mxu0 0
      %395 = vmatpush.bf16.msra.mxu0 0
      %396 = vmatpush.bf16.msra.mxu0 0
      %397 = vmatpush.bf16.msra.mxu0 %v372
      %398 = vmatmul.bf16.gmra.mxu0 %v366
      %v399 = vpop.f32.mrf.mxu0
      %v400 = vadd.f32 0.0, %v399
      %v401 = vpop.f32.mrf.mxu0
      %402 = vdwg.mxu0
      %403 = vmatpush.bf16.msra.mxu0 0
      %404 = vmatpush.bf16.msra.mxu0 0
      %405 = vmatpush.bf16.msra.mxu0 0
      %406 = vmatpush.bf16.msra.mxu0 0
      %407 = vmatpush.bf16.msra.mxu0 0
      %408 = vmatpush.bf16.msra.mxu0 0
      %409 = vmatpush.bf16.msra.mxu0 0
      %410 = vmatpush.bf16.msra.mxu0 %v375
      %411 = vmatmul.bf16.gmra.mxu0 %v366
      %v412 = vpop.f32.mrf.mxu0
      %v413 = vadd.f32 0.0, %v412
      %v414 = vpop.f32.mrf.mxu0
      %415 = vdwg.mxu0
      %v416 = vadd.f32 %v316, %v387
      %v417 = vadd.f32 %v329, %v400
      %v418 = vadd.f32 %v342, %v413
      %v419 = vld [vmem:[%s207] sm:$0x3f]
      %s420 = scalar_lea.vmem %s0, 6
      %v421 = vld [vmem:[%s420] sm:$0x3]
      %423 = vst [vmem:[#allocation1] ss:$4 sm:$0xff] %v419
      %v424 = vld.sshfl [vmem:[#allocation1] sm:$0xff pattern:$0x73625140]
      %v426 = vld.sshfl [vmem:[#allocation1 + $0x8] sm:$0xff pattern:$0x73625140]
      %v428 = vld.sshfl [vmem:[#allocation1 + $0x10] sm:$0xff pattern:$0x73625140]
      %430 = vrot.lane.b32.xlu0 %v424, 110
      %v431 = vpop.permute.xlu0 %430
      %432 = vrot.lane.b32.xlu0 %v426, 110
      %v433 = vpop.permute.xlu0 %432
      %434 = vrot.lane.b32.xlu0 %v428, 110
      %v435 = vpop.permute.xlu0 %434
      %vm436 = vcmask 900096
      %v437 = vsel %vm436, %v431, %v433
      %v438 = vsel %vm436, %v433, %v435
      %v440 = vsel %vm240, %v421, 0
      %v443 = vsel %vm244, %v437, 0
      %v446 = vsel %vm244, %v438, 0
      %v449 = vsel %vm244, %v435, 0
      %451 = vmatpush.bf16.msra.mxu0 0
      %452 = vmatpush.bf16.msra.mxu0 0
      %453 = vmatpush.bf16.msra.mxu0 0
      %454 = vmatpush.bf16.msra.mxu0 0
      %455 = vmatpush.bf16.msra.mxu0 0
      %456 = vmatpush.bf16.msra.mxu0 0
      %457 = vmatpush.bf16.msra.mxu0 0
      %458 = vmatpush.bf16.msra.mxu0 %v443
      %459 = vmatmul.bf16.gmra.mxu0 %v440
      %v460 = vpop.f32.mrf.mxu0
      %v461 = vadd.f32 0.0, %v460
      %v462 = vpop.f32.mrf.mxu0
      %463 = vdwg.mxu0
      %464 = vmatpush.bf16.msra.mxu0 0
      %465 = vmatpush.bf16.msra.mxu0 0
      %466 = vmatpush.bf16.msra.mxu0 0
      %467 = vmatpush.bf16.msra.mxu0 0
      %468 = vmatpush.bf16.msra.mxu0 0
      %469 = vmatpush.bf16.msra.mxu0 0
      %470 = vmatpush.bf16.msra.mxu0 0
      %471 = vmatpush.bf16.msra.mxu0 %v446
      %472 = vmatmul.bf16.gmra.mxu0 %v440
      %v473 = vpop.f32.mrf.mxu0
      %v474 = vadd.f32 0.0, %v473
      %v475 = vpop.f32.mrf.mxu0
      %476 = vdwg.mxu0
      %477 = vmatpush.bf16.msra.mxu0 0
      %478 = vmatpush.bf16.msra.mxu0 0
      %479 = vmatpush.bf16.msra.mxu0 0
      %480 = vmatpush.bf16.msra.mxu0 0
      %481 = vmatpush.bf16.msra.mxu0 0
      %482 = vmatpush.bf16.msra.mxu0 0
      %483 = vmatpush.bf16.msra.mxu0 0
      %484 = vmatpush.bf16.msra.mxu0 %v449
      %485 = vmatmul.bf16.gmra.mxu0 %v440
      %v486 = vpop.f32.mrf.mxu0
      %v487 = vadd.f32 0.0, %v486
      %v488 = vpop.f32.mrf.mxu0
      %489 = vdwg.mxu0
      %v490 = vadd.f32 %v416, %v461
      %v491 = vadd.f32 %v417, %v474
      %v492 = vadd.f32 %v418, %v487
      %v493 = vld [vmem:[%s207] sm:$0x3f]
      %s494 = scalar_lea.vmem %s0, 8
      %v495 = vld [vmem:[%s494] sm:$0x3]
      %497 = vst [vmem:[#allocation1] ss:$4 sm:$0xff] %v493
      %v498 = vld.sshfl [vmem:[#allocation1] sm:$0xff pattern:$0x73625140]
      %v500 = vld.sshfl [vmem:[#allocation1 + $0x8] sm:$0xff pattern:$0x73625140]
      %v502 = vld.sshfl [vmem:[#allocation1 + $0x10] sm:$0xff pattern:$0x73625140]
      %504 = vrot.lane.b32.xlu0 %v498, 109
      %v505 = vpop.permute.xlu0 %504
      %506 = vrot.lane.b32.xlu0 %v500, 109
      %v507 = vpop.permute.xlu0 %506
      %508 = vrot.lane.b32.xlu0 %v502, 109
      %v509 = vpop.permute.xlu0 %508
      %vm510 = vcmask 891904
      %v511 = vsel %vm510, %v505, %v507
      %v512 = vsel %vm510, %v507, %v509
      %v514 = vsel %vm240, %v495, 0
      %v517 = vsel %vm244, %v511, 0
      %v520 = vsel %vm244, %v512, 0
      %v523 = vsel %vm244, %v509, 0
      %525 = vmatpush.bf16.msra.mxu0 0
      %526 = vmatpush.bf16.msra.mxu0 0
      %527 = vmatpush.bf16.msra.mxu0 0
      %528 = vmatpush.bf16.msra.mxu0 0
      %529 = vmatpush.bf16.msra.mxu0 0
      %530 = vmatpush.bf16.msra.mxu0 0
      %531 = vmatpush.bf16.msra.mxu0 0
      %532 = vmatpush.bf16.msra.mxu0 %v517
      %533 = vmatmul.bf16.gmra.mxu0 %v514
      %v534 = vpop.f32.mrf.mxu0
      %v535 = vadd.f32 0.0, %v534
      %v536 = vpop.f32.mrf.mxu0
      %537 = vdwg.mxu0
      %538 = vmatpush.bf16.msra.mxu0 0
      %539 = vmatpush.bf16.msra.mxu0 0
      %540 = vmatpush.bf16.msra.mxu0 0
      %541 = vmatpush.bf16.msra.mxu0 0
      %542 = vmatpush.bf16.msra.mxu0 0
      %543 = vmatpush.bf16.msra.mxu0 0
      %544 = vmatpush.bf16.msra.mxu0 0
      %545 = vmatpush.bf16.msra.mxu0 %v520
      %546 = vmatmul.bf16.gmra.mxu0 %v514
      %v547 = vpop.f32.mrf.mxu0
      %v548 = vadd.f32 0.0, %v547
      %v549 = vpop.f32.mrf.mxu0
      %550 = vdwg.mxu0
      %551 = vmatpush.bf16.msra.mxu0 0
      %552 = vmatpush.bf16.msra.mxu0 0
      %553 = vmatpush.bf16.msra.mxu0 0
      %554 = vmatpush.bf16.msra.mxu0 0
      %555 = vmatpush.bf16.msra.mxu0 0
      %556 = vmatpush.bf16.msra.mxu0 0
      %557 = vmatpush.bf16.msra.mxu0 0
      %558 = vmatpush.bf16.msra.mxu0 %v523
      %559 = vmatmul.bf16.gmra.mxu0 %v514
      %v560 = vpop.f32.mrf.mxu0
      %v561 = vadd.f32 0.0, %v560
      %v562 = vpop.f32.mrf.mxu0
      %563 = vdwg.mxu0
      %v564 = vadd.f32 %v490, %v535
      %v565 = vadd.f32 %v491, %v548
      %v566 = vadd.f32 %v492, %v561
      %v567 = vld [vmem:[%s207] sm:$0x3f]
      %s568 = scalar_lea.vmem %s0, 10
      %v569 = vld [vmem:[%s568] sm:$0x3]
      %571 = vst [vmem:[#allocation1] ss:$4 sm:$0xff] %v567
      %v572 = vld.sshfl [vmem:[#allocation1] sm:$0xff pattern:$0x73625140]
      %v574 = vld.sshfl [vmem:[#allocation1 + $0x8] sm:$0xff pattern:$0x73625140]
      %v576 = vld.sshfl [vmem:[#allocation1 + $0x10] sm:$0xff pattern:$0x73625140]
      %578 = vrot.lane.b32.xlu0 %v572, 108
      %v579 = vpop.permute.xlu0 %578
      %580 = vrot.lane.b32.xlu0 %v574, 108
      %v581 = vpop.permute.xlu0 %580
      %582 = vrot.lane.b32.xlu0 %v576, 108
      %v583 = vpop.permute.xlu0 %582
      %vm584 = vcmask 883712
      %v585 = vsel %vm584, %v579, %v581
      %v586 = vsel %vm584, %v581, %v583
      %v588 = vsel %vm240, %v569, 0
      %v591 = vsel %vm244, %v585, 0
      %v594 = vsel %vm244, %v586, 0
      %v597 = vsel %vm244, %v583, 0
      %599 = vmatpush.bf16.msra.mxu0 0
      %600 = vmatpush.bf16.msra.mxu0 0
      %601 = vmatpush.bf16.msra.mxu0 0
      %602 = vmatpush.bf16.msra.mxu0 0
      %603 = vmatpush.bf16.msra.mxu0 0
      %604 = vmatpush.bf16.msra.mxu0 0
      %605 = vmatpush.bf16.msra.mxu0 0
      %606 = vmatpush.bf16.msra.mxu0 %v591
      %607 = vmatmul.bf16.gmra.mxu0 %v588
      %v608 = vpop.f32.mrf.mxu0
      %v609 = vadd.f32 0.0, %v608
      %v610 = vpop.f32.mrf.mxu0
      %611 = vdwg.mxu0
      %612 = vmatpush.bf16.msra.mxu0 0
      %613 = vmatpush.bf16.msra.mxu0 0
      %614 = vmatpush.bf16.msra.mxu0 0
      %615 = vmatpush.bf16.msra.mxu0 0
      %616 = vmatpush.bf16.msra.mxu0 0
      %617 = vmatpush.bf16.msra.mxu0 0
      %618 = vmatpush.bf16.msra.mxu0 0
      %619 = vmatpush.bf16.msra.mxu0 %v594
      %620 = vmatmul.bf16.gmra.mxu0 %v588
      %v621 = vpop.f32.mrf.mxu0
      %v622 = vadd.f32 0.0, %v621
      %v623 = vpop.f32.mrf.mxu0
      %624 = vdwg.mxu0
      %625 = vmatpush.bf16.msra.mxu0 0
      %626 = vmatpush.bf16.msra.mxu0 0
      %627 = vmatpush.bf16.msra.mxu0 0
      %628 = vmatpush.bf16.msra.mxu0 0
      %629 = vmatpush.bf16.msra.mxu0 0
      %630 = vmatpush.bf16.msra.mxu0 0
      %631 = vmatpush.bf16.msra.mxu0 0
      %632 = vmatpush.bf16.msra.mxu0 %v597
      %633 = vmatmul.bf16.gmra.mxu0 %v588
      %v634 = vpop.f32.mrf.mxu0
      %v635 = vadd.f32 0.0, %v634
      %v636 = vpop.f32.mrf.mxu0
      %637 = vdwg.mxu0
      %v638 = vadd.f32 %v564, %v609
      %v639 = vadd.f32 %v565, %v622
      %v640 = vadd.f32 %v566, %v635
      %v641 = vld [vmem:[%s207] sm:$0x3f]
      %s642 = scalar_lea.vmem %s0, 12
      %v643 = vld [vmem:[%s642] sm:$0x3]
      %645 = vst [vmem:[#allocation1] ss:$4 sm:$0xff] %v641
      %v646 = vld.sshfl [vmem:[#allocation1] sm:$0xff pattern:$0x73625140]
      %v648 = vld.sshfl [vmem:[#allocation1 + $0x8] sm:$0xff pattern:$0x73625140]
      %v650 = vld.sshfl [vmem:[#allocation1 + $0x10] sm:$0xff pattern:$0x73625140]
      %652 = vrot.lane.b32.xlu0 %v646, 92
      %v653 = vpop.permute.xlu0 %652
      %654 = vrot.lane.b32.xlu0 %v648, 92
      %v655 = vpop.permute.xlu0 %654
      %656 = vrot.lane.b32.xlu0 %v650, 92
      %v657 = vpop.permute.xlu0 %656
      %vm658 = vcmask 752640
      %v659 = vsel %vm658, %v653, %v655
      %v660 = vsel %vm658, %v655, %v657
      %v662 = vsel %vm240, %v643, 0
      %v665 = vsel %vm244, %v659, 0
      %v668 = vsel %vm244, %v660, 0
      %v671 = vsel %vm244, %v657, 0
      %673 = vmatpush.bf16.msra.mxu0 0
      %674 = vmatpush.bf16.msra.mxu0 0
      %675 = vmatpush.bf16.msra.mxu0 0
      %676 = vmatpush.bf16.msra.mxu0 0
      %677 = vmatpush.bf16.msra.mxu0 0
      %678 = vmatpush.bf16.msra.mxu0 0
      %679 = vmatpush.bf16.msra.mxu0 0
      %680 = vmatpush.bf16.msra.mxu0 %v665
      %681 = vmatmul.bf16.gmra.mxu0 %v662
      %v682 = vpop.f32.mrf.mxu0
      %v683 = vadd.f32 0.0, %v682
      %v684 = vpop.f32.mrf.mxu0
      %685 = vdwg.mxu0
      %686 = vmatpush.bf16.msra.mxu0 0
      %687 = vmatpush.bf16.msra.mxu0 0
      %688 = vmatpush.bf16.msra.mxu0 0
      %689 = vmatpush.bf16.msra.mxu0 0
      %690 = vmatpush.bf16.msra.mxu0 0
      %691 = vmatpush.bf16.msra.mxu0 0
      %692 = vmatpush.bf16.msra.mxu0 0
      %693 = vmatpush.bf16.msra.mxu0 %v668
      %694 = vmatmul.bf16.gmra.mxu0 %v662
      %v695 = vpop.f32.mrf.mxu0
      %v696 = vadd.f32 0.0, %v695
      %v697 = vpop.f32.mrf.mxu0
      %698 = vdwg.mxu0
      %699 = vmatpush.bf16.msra.mxu0 0
      %700 = vmatpush.bf16.msra.mxu0 0
      %701 = vmatpush.bf16.msra.mxu0 0
      %702 = vmatpush.bf16.msra.mxu0 0
      %703 = vmatpush.bf16.msra.mxu0 0
      %704 = vmatpush.bf16.msra.mxu0 0
      %705 = vmatpush.bf16.msra.mxu0 0
      %706 = vmatpush.bf16.msra.mxu0 %v671
      %707 = vmatmul.bf16.gmra.mxu0 %v662
      %v708 = vpop.f32.mrf.mxu0
      %v709 = vadd.f32 0.0, %v708
      %v710 = vpop.f32.mrf.mxu0
      %711 = vdwg.mxu0
      %v712 = vadd.f32 %v638, %v683
      %v713 = vadd.f32 %v639, %v696
      %v714 = vadd.f32 %v640, %v709
      %v715 = vld [vmem:[%s207] sm:$0x3f]
      %s716 = scalar_lea.vmem %s0, 14
      %v717 = vld [vmem:[%s716] sm:$0x3]
      %719 = vst [vmem:[#allocation1] ss:$4 sm:$0xff] %v715
      %v720 = vld.sshfl [vmem:[#allocation1] sm:$0xff pattern:$0x73625140]
      %v722 = vld.sshfl [vmem:[#allocation1 + $0x8] sm:$0xff pattern:$0x73625140]
      %v724 = vld.sshfl [vmem:[#allocation1 + $0x10] sm:$0xff pattern:$0x73625140]
      %726 = vrot.lane.b32.xlu0 %v720, 91
      %v727 = vpop.permute.xlu0 %726
      %728 = vrot.lane.b32.xlu0 %v722, 91
      %v729 = vpop.permute.xlu0 %728
      %730 = vrot.lane.b32.xlu0 %v724, 91
      %v731 = vpop.permute.xlu0 %730
      %vm732 = vcmask 744448
      %v733 = vsel %vm732, %v727, %v729
      %v734 = vsel %vm732, %v729, %v731
      %v736 = vsel %vm240, %v717, 0
      %v739 = vsel %vm244, %v733, 0
      %v742 = vsel %vm244, %v734, 0
      %v745 = vsel %vm244, %v731, 0
      %747 = vmatpush.bf16.msra.mxu0 0
      %748 = vmatpush.bf16.msra.mxu0 0
      %749 = vmatpush.bf16.msra.mxu0 0
      %750 = vmatpush.bf16.msra.mxu0 0
      %751 = vmatpush.bf16.msra.mxu0 0
      %752 = vmatpush.bf16.msra.mxu0 0
      %753 = vmatpush.bf16.msra.mxu0 0
      %754 = vmatpush.bf16.msra.mxu0 %v739
      %755 = vmatmul.bf16.gmra.mxu0 %v736
      %v756 = vpop.f32.mrf.mxu0
      %v757 = vadd.f32 0.0, %v756
      %v758 = vpop.f32.mrf.mxu0
      %759 = vdwg.mxu0
      %760 = vmatpush.bf16.msra.mxu0 0
      %761 = vmatpush.bf16.msra.mxu0 0
      %762 = vmatpush.bf16.msra.mxu0 0
      %763 = vmatpush.bf16.msra.mxu0 0
      %764 = vmatpush.bf16.msra.mxu0 0
      %765 = vmatpush.bf16.msra.mxu0 0
      %766 = vmatpush.bf16.msra.mxu0 0
      %767 = vmatpush.bf16.msra.mxu0 %v742
      %768 = vmatmul.bf16.gmra.mxu0 %v736
      %v769 = vpop.f32.mrf.mxu0
      %v770 = vadd.f32 0.0, %v769
      %v771 = vpop.f32.mrf.mxu0
      %772 = vdwg.mxu0
      %773 = vmatpush.bf16.msra.mxu0 0
      %774 = vmatpush.bf16.msra.mxu0 0
      %775 = vmatpush.bf16.msra.mxu0 0
      %776 = vmatpush.bf16.msra.mxu0 0
      %777 = vmatpush.bf16.msra.mxu0 0
      %778 = vmatpush.bf16.msra.mxu0 0
      %779 = vmatpush.bf16.msra.mxu0 0
      %780 = vmatpush.bf16.msra.mxu0 %v745
      %781 = vmatmul.bf16.gmra.mxu0 %v736
      %v782 = vpop.f32.mrf.mxu0
      %v783 = vadd.f32 0.0, %v782
      %v784 = vpop.f32.mrf.mxu0
      %785 = vdwg.mxu0
      %v786 = vadd.f32 %v712, %v757
      %v787 = vadd.f32 %v713, %v770
      %v788 = vadd.f32 %v714, %v783
      %v789 = vld [vmem:[%s207] sm:$0x3f]
      %s790 = scalar_lea.vmem %s0, 16
      %v791 = vld [vmem:[%s790] sm:$0x3]
      %793 = vst [vmem:[#allocation1] ss:$4 sm:$0xff] %v789
      %v794 = vld.sshfl [vmem:[#allocation1] sm:$0xff pattern:$0x73625140]
      %v796 = vld.sshfl [vmem:[#allocation1 + $0x8] sm:$0xff pattern:$0x73625140]
      %v798 = vld.sshfl [vmem:[#allocation1 + $0x10] sm:$0xff pattern:$0x73625140]
      %800 = vrot.lane.b32.xlu0 %v794, 90
      %v801 = vpop.permute.xlu0 %800
      %802 = vrot.lane.b32.xlu0 %v796, 90
      %v803 = vpop.permute.xlu0 %802
      %804 = vrot.lane.b32.xlu0 %v798, 90
      %v805 = vpop.permute.xlu0 %804
      %vm806 = vcmask 736256
      %v807 = vsel %vm806, %v801, %v803
      %v808 = vsel %vm806, %v803, %v805
      %v810 = vsel %vm240, %v791, 0
      %v813 = vsel %vm244, %v807, 0
      %v816 = vsel %vm244, %v808, 0
      %v819 = vsel %vm244, %v805, 0
      %821 = vmatpush.bf16.msra.mxu0 0
      %822 = vmatpush.bf16.msra.mxu0 0
      %823 = vmatpush.bf16.msra.mxu0 0
      %824 = vmatpush.bf16.msra.mxu0 0
      %825 = vmatpush.bf16.msra.mxu0 0
      %826 = vmatpush.bf16.msra.mxu0 0
      %827 = vmatpush.bf16.msra.mxu0 0
      %828 = vmatpush.bf16.msra.mxu0 %v813
      %829 = vmatmul.bf16.gmra.mxu0 %v810
      %v830 = vpop.f32.mrf.mxu0
      %v831 = vadd.f32 0.0, %v830
      %v832 = vpop.f32.mrf.mxu0
      %833 = vdwg.mxu0
      %834 = vmatpush.bf16.msra.mxu0 0
      %835 = vmatpush.bf16.msra.mxu0 0
      %836 = vmatpush.bf16.msra.mxu0 0
      %837 = vmatpush.bf16.msra.mxu0 0
      %838 = vmatpush.bf16.msra.mxu0 0
      %839 = vmatpush.bf16.msra.mxu0 0
      %840 = vmatpush.bf16.msra.mxu0 0
      %841 = vmatpush.bf16.msra.mxu0 %v816
      %842 = vmatmul.bf16.gmra.mxu0 %v810
      %v843 = vpop.f32.mrf.mxu0
      %v844 = vadd.f32 0.0, %v843
      %v845 = vpop.f32.mrf.mxu0
      %846 = vdwg.mxu0
      %847 = vmatpush.bf16.msra.mxu0 0
      %848 = vmatpush.bf16.msra.mxu0 0
      %849 = vmatpush.bf16.msra.mxu0 0
      %850 = vmatpush.bf16.msra.mxu0 0
      %851 = vmatpush.bf16.msra.mxu0 0
      %852 = vmatpush.bf16.msra.mxu0 0
      %853 = vmatpush.bf16.msra.mxu0 0
      %854 = vmatpush.bf16.msra.mxu0 %v819
      %855 = vmatmul.bf16.gmra.mxu0 %v810
      %v856 = vpop.f32.mrf.mxu0
      %v857 = vadd.f32 0.0, %v856
      %v858 = vpop.f32.mrf.mxu0
      %859 = vdwg.mxu0
      %v860 = vadd.f32 %v786, %v831
      %v861 = vadd.f32 %v787, %v844
      %v862 = vadd.f32 %v788, %v857
      %v863 = vld [vmem:[%s1] sm:$0xf]
      %865 = vset.pattern.permute.xlu0 0
      %866 = vperm.xlu0 %865, %v863
      %v867 = vpop.permute.xlu0 %866
      %v869 = vadd.f32 %v860, %v867
      %v870 = vadd.f32 %v861, %v867
      %v871 = vadd.f32 %v862, %v867
      %v872 = vld [vmem:[%s212] sm:$0x3f]
      %v873 = vunpack.c.l.bf16 %v872
      %v874 = vunpack.c.h.bf16 %v872
      %877 = vst [vmem:[#allocation1] ss:$2 sm:$0xff] %v873
      %s878 = scalar_lea.vmem [#allocation1], 16
      %879 = vst [vmem:[%s878] ss:$2 sm:$0xff] %v874
      %v880 = vld.sshfl [vmem:[#allocation1] sm:$0xff pattern:$0x75316420]
      %v881 = vld.sshfl [vmem:[#allocation1 + $0x8] sm:$0xff pattern:$0x75316420]
      %v882 = vld.sshfl [vmem:[#allocation1 + $0x10] sm:$0xff pattern:$0x75316420]
      %v886 = vadd.f32 %v869, %v880
      %v887 = vadd.f32 %v870, %v881
      %v888 = vadd.f32 %v871, %v882
      %v889 = vmax.f32 %v886, 0.0
      %v890 = vmax.f32 %v887, 0.0
      %v891 = vmax.f32 %v888, 0.0
      %v894 = vrot.slane %v890, 4
      %vm895 = vcmask 1043456
      %v896 = vsel %vm895, %v889, %v894
      %898 = vst [vmem:[%s217] sm:$0xff] %v896
      %vm899 = vcmask 257024
      %900 = vst.msk [vmem:[%s217 + $0x8] sm:$0xf] %vm899, %v891
      %p901 = scmp.lt.s32.totalorder %s15, 1
      %s902 = scalar_select %p901, %s15, 1
      %s903 = smul.addr %s902, 3
      %s904 = smul.addr %s903, 4
      %s905 = scalar_lea.vmem %s4, %s904
      // Predicated region
      $region37: #{a_call__.5} parent=35 // pred_check
        %p906 = pneg %p127
      $region38: #{a_call__.5} parent=35 // pred_check_branch
        %908 = sbr.rel (%p906) target = $region40
      $region39: #{a_call__.5} parent=35 // pred_region
        _
      $region40: #{a_call__.5} parent=35 // pred_fallthru
        _
    $region36: #{a_call__.5} parent=5 // pred_fallthru
      _
    %p909 = scmp.le.s32.totalorder 2, %s10
    // Predicated region
    $region41: #{a_call__.5} parent=5 // pred_check
      %p910 = pneg %p909
    $region42: #{a_call__.5} parent=5 // pred_check_branch
      %912 = sbr.rel (%p910) target = $region44
    $region43: #{a_call__.5} parent=5 // pred_region
      %s913 = ssub.s32 %s10, 2
      // Predicated region
      $region45: #{a_call__.5} parent=43 // pred_check
        %p914 = pneg %p133
      $region46: #{a_call__.5} parent=43 // pred_check_branch
        %916 = sbr.rel (%p914) target = $region48
      $region47: #{a_call__.5} parent=43 // pred_region
        %p917 = scmp.lt.s32.totalorder %s16, 1
        %s918 = scalar_select %p917, %s16, 1
        %s919 = smul.addr %s918, 3
        %s920 = smul.addr %s919, 4
        %s921 = scalar_lea.vmem %s4, %s920
      $region48: #{a_call__.5} parent=43 // pred_fallthru
        _
    $region44: #{a_call__.5} parent=5 // pred_fallthru
      _
  $region6: #{a_call__.5} parent=0 // loop_footer
    %s14 = sadd.s32 1, %s10
  $region7: #{a_call__.5} parent=0 // loop_footer_branch
    %9 = sbr.rel target = $region3
  $region8: #{a_call__.5} parent=0 // loop_exit
    _

</llo_original>
